<compile_context>
chip_gen: v7x
topology: tpu7x:2x2x1
jax: 0.10.0
libtpu: 0.0.40
codegen_flags: <defaults>
</compile_context>

<pallas_src>
import functools

import jax
import jax.numpy as jnp
from jax.experimental import pallas as pl
from jax.experimental.pallas import tpu as pltpu

LANE = 128


def _round_up(x, m):
    return ((x + m - 1) // m) * m


# --------------------------------------------------------------------------- #
# Kernel
# --------------------------------------------------------------------------- #
def _mlp_kernel(negative_slope, num_used_layers, x_ref, *refs):
    """refs = (w0, b0, w1, b1, ..., wK, bK, out_ref).

    x tile is f32 (tile_n, in_dim) and is cast to bf16 on the VPU; weights are
    bf16 (full-rate MXU), biases f32. Matmuls accumulate in f32; bias add and
    LeakyReLU stay in f32. The final matmul emits the narrow num_classes width
    directly so the output store/DMA is minimal.
    """
    out_ref = refs[-1]
    param_refs = refs[:-1]
    assert len(param_refs) == 2 * num_used_layers

    h = x_ref[...]
    for i in range(num_used_layers):
        w = param_refs[2 * i][...]
        b = param_refs[2 * i + 1][...]
        h = jnp.dot(h.astype(w.dtype), w, preferred_element_type=jnp.float32) + b
        if i < num_used_layers - 1:
            h = jnp.where(h >= 0, h, negative_slope * h)  # LeakyReLU

    out_ref[...] = h.astype(out_ref.dtype)


# --------------------------------------------------------------------------- #
# One-time parameter prep (hoisted out of the forward call)
# --------------------------------------------------------------------------- #
def prepare_params(weights, biases, compute_dtype=jnp.bfloat16):
    """Cast to bf16 and zero-pad ONLY the hidden feature dims to 128.

    Zero padding is numerically exact for this MLP (zero weight rows/cols and
    zero bias entries propagate zeros through LeakyReLU). The first layer's
    contraction dim (= in_dim, read straight from unpadded x) and the final
    layer's output dim (= num_classes, written straight to HBM) stay unpadded
    so HBM traffic on both ends of the kernel is minimal.
    """
    num_used = len(weights)
    w_p, b_p = [], []
    for idx, (w, b) in enumerate(zip(weights, biases)):
        k, n = w.shape
        k_p = k if idx == 0 else _round_up(k, LANE)
        n_p = n if idx == num_used - 1 else _round_up(n, LANE)
        wp = jnp.zeros((k_p, n_p), compute_dtype)
        wp = wp.at[:k, :n].set(w.astype(compute_dtype))
        bp = jnp.zeros((1, n_p), jnp.float32)
        bp = bp.at[0, :n].set(b.astype(jnp.float32))
        w_p.append(wp)
        b_p.append(bp)
    return w_p, b_p


def _vmem_capacity_bytes():
    try:
        info = pltpu.get_tpu_info()
        cap = getattr(info, "vmem_capacity_bytes", None)
        if cap:
            return int(cap)
    except Exception:
        pass
    return 64 << 20  # conservative default: v7x per-TensorCore VMEM


# --------------------------------------------------------------------------- #
# Forward wrapper
# --------------------------------------------------------------------------- #
def mlp_forward(x, w_p, b_p, *, negative_slope=0.01, tile_n=512):
    """Run the MLP forward pass with a single Pallas kernel.

    x:   (N, in_dim) float32 node features (unpadded)
    w_p: prepared weights from prepare_params (bf16, (in_f, out_f) layout)
    b_p: prepared biases  from prepare_params (f32, (1, out_f))
    """
    N, in_dim = x.shape
    num_used = len(w_p)
    num_classes = w_p[-1].shape[1]  # final out dim is kept unpadded
    assert w_p[0].shape[0] == in_dim

    # bf16 activations pack two rows per sublane -> align row tiles to 16.
    sublane = 16

    # Row tiling: large tiles amortize the ~0.35us/step grid overhead, but keep
    # at least 2 grid steps so the 'parallel' axis shards across v7x's two TCs.
    tile = max(sublane, min(tile_n, 1024))
    tile = min(tile, _round_up(N, sublane))
    if N >= 2 * sublane:
        tile = min(tile, _round_up(pl.cdiv(N, 2), sublane))
    tile = _round_up(tile, sublane)
    n_pad = _round_up(N, tile)
    grid = (n_pad // tile,)

    # Only pad rows (never the feature/lane axis); skip entirely when N divides.
    if n_pad != N:
        x_in = jnp.zeros((n_pad, in_dim), x.dtype).at[:N, :].set(x)
    else:
        x_in = x

    param_args = []
    for wp, bp in zip(w_p, b_p):
        param_args.append(wp)
        param_args.append(bp)

    def build_in_specs(single_buffer_params):
        specs = [pl.BlockSpec((tile, in_dim), lambda i: (i, 0))]
        for wp, bp in zip(w_p, b_p):
            if single_buffer_params:
                # Constant index_map -> block is VMEM-resident across the grid;
                # a single buffer halves its footprint (matters on v7x 64 MiB).
                specs.append(pl.BlockSpec(wp.shape, lambda i: (0, 0),
                                          pipeline_mode=pl.Buffered(1)))
                specs.append(pl.BlockSpec(bp.shape, lambda i: (0, 0),
                                          pipeline_mode=pl.Buffered(1)))
            else:
                specs.append(pl.BlockSpec(wp.shape, lambda i: (0, 0)))
                specs.append(pl.BlockSpec(bp.shape, lambda i: (0, 0)))
        return specs

    out_spec = pl.BlockSpec((tile, num_classes), lambda i: (i, 0))

    # Advisory cost estimate for XLA scheduling around the custom call.
    flops = 2 * n_pad * sum(w.shape[0] * w.shape[1] for w in w_p)
    bytes_accessed = (
        x_in.size * x_in.dtype.itemsize
        + sum(w.size * w.dtype.itemsize for w in w_p)
        + sum(b.size * b.dtype.itemsize for b in b_p)
        + n_pad * num_classes * 4
    )
    cost = pl.CostEstimate(flops=int(flops), transcendentals=0,
                           bytes_accessed=int(bytes_accessed))

    max_width = max(w.shape[1] for w in w_p)

    def vmem_limit(single_buffer_params):
        pbuf = 1 if single_buffer_params else 2
        est = (
            2 * tile * in_dim * x_in.dtype.itemsize        # input tile, 2 bufs
            + 2 * tile * num_classes * 4                   # output tile, 2 bufs
            + pbuf * sum(w.size * w.dtype.itemsize for w in w_p)
            + pbuf * sum(b.size * b.dtype.itemsize for b in b_p)
            + 4 * tile * max_width * 4                     # f32 intermediates
        )
        cap = _vmem_capacity_bytes() - (12 << 20)          # compiler headroom
        return int(max(16 << 20, min(max(2 * est, 32 << 20), cap)))

    kernel = functools.partial(_mlp_kernel, float(negative_slope), num_used)

    def run(single_buffer_params):
        return pl.pallas_call(
            kernel,
            out_shape=jax.ShapeDtypeStruct((n_pad, num_classes), jnp.float32),
            grid=grid,
            in_specs=build_in_specs(single_buffer_params),
            out_specs=out_spec,
            compiler_params=pltpu.CompilerParams(
                dimension_semantics=("parallel",),
                vmem_limit_bytes=vmem_limit(single_buffer_params),
            ),
            cost_estimate=cost,
        )(x_in, *param_args)

    try:
        out_padded = run(True)
    except Exception:
        # TODO(synk): pl.Buffered(1) not accepted on this jax version; fall back
        # to default double-buffered parameter blocks (identical semantics).
        out_padded = run(False)

    out = out_padded if n_pad == N else out_padded[:N]
    return out.astype(x.dtype)


# --------------------------------------------------------------------------- #
# Parameter init (mimics torch.nn.Linear reset_parameters) + pure-JAX reference
# --------------------------------------------------------------------------- #
def init_mlp_params(key, in_dim, num_layers, num_hidden, num_classes):
    """Deterministically initialize all layers the PyTorch module constructs.

    Returns (all_weights, all_biases) with num_layers + 1 layers, weights in
    (in_features, out_features) layout.
    """
    dims = [(in_dim, num_hidden)]
    for _ in range(1, num_layers):
        dims.append((num_hidden, num_hidden))
    dims.append((num_hidden, num_classes))

    weights, biases = [], []
    for (fan_in, fan_out) in dims:
        key, kw, kb = jax.random.split(key, 3)
        bound_w = (6.0 / fan_in) ** 0.5 / (5.0 ** 0.5)  # kaiming_uniform(a=sqrt(5))
        w = jax.random.uniform(
            kw, (fan_in, fan_out), jnp.float32, minval=-bound_w, maxval=bound_w
        )
        bound_b = 1.0 / (fan_in ** 0.5)
        b = jax.random.uniform(
            kb, (fan_out,), jnp.float32, minval=-bound_b, maxval=bound_b
        )
        weights.append(w)
        biases.append(b)
    return weights, biases


def reference_forward(x, used_w, used_b, negative_slope=0.01):
    """Pure-JAX f32 reference matching the PyTorch forward (eval mode)."""
    h = x  # TODO(synk): nn.Dropout(0.1) applied as identity (eval-mode semantics).
    for w, b in zip(used_w[:-1], used_b[:-1]):
        h = h @ w + b
        h = jnp.where(h >= 0, h, negative_slope * h)
    return h @ used_w[-1] + used_b[-1]


if __name__ == "__main__":
    # Node features (N, in_dim). N chosen so the grid has multiple 'parallel'
    # steps (pipelining / v7x megacore) while staying small.
    N = 512
    in_dim = 16
    num_layers = 3
    num_hidden = 32
    num_classes = 4
    negative_slope = 0.01  # F.leaky_relu default (forward() doesn't pass 0.2)

    key = jax.random.PRNGKey(0)
    key, kx = jax.random.split(key)
    x = jax.random.normal(kx, (N, in_dim), jnp.float32)

    all_w, all_b = init_mlp_params(key, in_dim, num_layers, num_hidden, num_classes)

    # forward() uses layers[0 .. num_layers-2] (with activation) and layers[-1];
    # layer index (num_layers-1) is constructed but never used — match exactly.
    used_w = all_w[: num_layers - 1] + [all_w[-1]]
    used_b = all_b[: num_layers - 1] + [all_b[-1]]

    # One-time parameter prep (pad hidden dims / cast to bf16), hoisted out of
    # the forward call so repeated calls don't re-pad on device.
    w_p, b_p = prepare_params(used_w, used_b)

    logits = mlp_forward(x, w_p, b_p, negative_slope=negative_slope, tile_n=512)
    logits = jax.block_until_ready(logits)

    ref = reference_forward(x, used_w, used_b, negative_slope)
    assert logits.shape == (N, num_classes)
    # bf16 matmuls with f32 accumulation: loosen tolerance vs the f32 reference.
    assert jnp.allclose(logits, ref, atol=5e-2, rtol=5e-2), "mismatch vs reference"

    print("KERNEL_OK")
</pallas_src>

<mosaic_0001>
module attributes {stable_mosaic.version = 11 : i64} {
  func.func @_mlp_kernel(%arg0: i32, %arg1: memref<256x16xf32, #tpu.memory_space<vmem>>, %arg2: memref<16x128xbf16, #tpu.memory_space<vmem>>, %arg3: memref<1x128xf32, #tpu.memory_space<vmem>>, %arg4: memref<128x128xbf16, #tpu.memory_space<vmem>>, %arg5: memref<1x128xf32, #tpu.memory_space<vmem>>, %arg6: memref<128x4xbf16, #tpu.memory_space<vmem>>, %arg7: memref<1x4xf32, #tpu.memory_space<vmem>>, %arg8: memref<256x4xf32, #tpu.memory_space<vmem>>) attributes {dimension_semantics = [#tpu.dimension_semantics<parallel>], iteration_bounds = array<i64: 2>, scalar_prefetch = 0 : i64, scratch_operands = 0 : i64, tpu.core_type = #tpu.core_type<tc>, window_params = [{transform_indices = @transform_0, window_bounds = array<i64: 256, 16>}, {pipeline_mode = #tpu.pipeline_mode<synchronous>, transform_indices = @transform_1, window_bounds = array<i64: 16, 128>}, {pipeline_mode = #tpu.pipeline_mode<synchronous>, transform_indices = @transform_2, window_bounds = array<i64: 1, 128>}, {pipeline_mode = #tpu.pipeline_mode<synchronous>, transform_indices = @transform_3, window_bounds = array<i64: 128, 128>}, {pipeline_mode = #tpu.pipeline_mode<synchronous>, transform_indices = @transform_4, window_bounds = array<i64: 1, 128>}, {pipeline_mode = #tpu.pipeline_mode<synchronous>, transform_indices = @transform_5, window_bounds = array<i64: 128, 4>}, {pipeline_mode = #tpu.pipeline_mode<synchronous>, transform_indices = @transform_6, window_bounds = array<i64: 1, 4>}, {transform_indices = @transform_7, window_bounds = array<i64: 256, 4>}]} {
    %c0 = arith.constant 0 : index
    %c0_0 = arith.constant 0 : index
    %0 = vector.load %arg1[%c0, %c0_0] : memref<256x16xf32, #tpu.memory_space<vmem>>, vector<256x16xf32>
    %c0_1 = arith.constant 0 : index
    %c0_2 = arith.constant 0 : index
    %1 = vector.load %arg2[%c0_1, %c0_2] : memref<16x128xbf16, #tpu.memory_space<vmem>>, vector<16x128xbf16>
    %c0_3 = arith.constant 0 : index
    %c0_4 = arith.constant 0 : index
    %2 = vector.load %arg3[%c0_3, %c0_4] : memref<1x128xf32, #tpu.memory_space<vmem>>, vector<1x128xf32>
    %3 = arith.truncf %0 : vector<256x16xf32> to vector<256x16xbf16>
    %cst = arith.constant dense<0.000000e+00> : vector<256x128xf32>
    %4 = tpu.matmul %3, %1, %cst {dimension_numbers = #tpu.dot_dimension_numbers<[1], [0], [0], [1], [0, 0, 1, 1], [], []>} : vector<256x16xbf16>, vector<16x128xbf16>, vector<256x128xf32> -> vector<256x128xf32>
    %5 = vector.broadcast %2 : vector<1x128xf32> to vector<256x128xf32>
    %6 = arith.addf %4, %5 : vector<256x128xf32>
    %cst_5 = arith.constant 0.000000e+00 : f32
    %7 = vector.broadcast %cst_5 : f32 to vector<256x128xf32>
    %8 = arith.cmpf oge, %6, %7 : vector<256x128xf32>
    %cst_6 = arith.constant 0.00999999977 : f32
    %9 = vector.broadcast %cst_6 : f32 to vector<256x128xf32>
    %10 = arith.mulf %9, %6 : vector<256x128xf32>
    %11 = arith.select %8, %6, %10 : vector<256x128xi1>, vector<256x128xf32>
    %c0_7 = arith.constant 0 : index
    %c0_8 = arith.constant 0 : index
    %12 = vector.load %arg4[%c0_7, %c0_8] : memref<128x128xbf16, #tpu.memory_space<vmem>>, vector<128x128xbf16>
    %c0_9 = arith.constant 0 : index
    %c0_10 = arith.constant 0 : index
    %13 = vector.load %arg5[%c0_9, %c0_10] : memref<1x128xf32, #tpu.memory_space<vmem>>, vector<1x128xf32>
    %14 = arith.truncf %11 : vector<256x128xf32> to vector<256x128xbf16>
    %cst_11 = arith.constant dense<0.000000e+00> : vector<256x128xf32>
    %15 = tpu.matmul %14, %12, %cst_11 {dimension_numbers = #tpu.dot_dimension_numbers<[1], [0], [0], [1], [0, 0, 1, 1], [], []>} : vector<256x128xbf16>, vector<128x128xbf16>, vector<256x128xf32> -> vector<256x128xf32>
    %16 = vector.broadcast %13 : vector<1x128xf32> to vector<256x128xf32>
    %17 = arith.addf %15, %16 : vector<256x128xf32>
    %cst_12 = arith.constant 0.000000e+00 : f32
    %18 = vector.broadcast %cst_12 : f32 to vector<256x128xf32>
    %19 = arith.cmpf oge, %17, %18 : vector<256x128xf32>
    %cst_13 = arith.constant 0.00999999977 : f32
    %20 = vector.broadcast %cst_13 : f32 to vector<256x128xf32>
    %21 = arith.mulf %20, %17 : vector<256x128xf32>
    %22 = arith.select %19, %17, %21 : vector<256x128xi1>, vector<256x128xf32>
    %c0_14 = arith.constant 0 : index
    %c0_15 = arith.constant 0 : index
    %23 = vector.load %arg6[%c0_14, %c0_15] : memref<128x4xbf16, #tpu.memory_space<vmem>>, vector<128x4xbf16>
    %c0_16 = arith.constant 0 : index
    %c0_17 = arith.constant 0 : index
    %24 = vector.load %arg7[%c0_16, %c0_17] : memref<1x4xf32, #tpu.memory_space<vmem>>, vector<1x4xf32>
    %25 = arith.truncf %22 : vector<256x128xf32> to vector<256x128xbf16>
    %cst_18 = arith.constant dense<0.000000e+00> : vector<256x4xf32>
    %26 = tpu.matmul %25, %23, %cst_18 {dimension_numbers = #tpu.dot_dimension_numbers<[1], [0], [0], [1], [0, 0, 1, 1], [], []>} : vector<256x128xbf16>, vector<128x4xbf16>, vector<256x4xf32> -> vector<256x4xf32>
    %27 = vector.broadcast %24 : vector<1x4xf32> to vector<256x4xf32>
    %28 = arith.addf %26, %27 : vector<256x4xf32>
    %c0_19 = arith.constant 0 : index
    %c0_20 = arith.constant 0 : index
    %29 = vector.load %arg8[%c0_19, %c0_20] : memref<256x4xf32, #tpu.memory_space<vmem>>, vector<256x4xf32>
    tpu.vector_store %arg8[%c0_19, %c0_20], %28 {strides = array<i32>} : memref<256x4xf32, #tpu.memory_space<vmem>>, vector<256x4xf32>,
    return
  }
  func.func @transform_0(%arg0: i32) -> (i32, i32) {
    %c0_i32 = arith.constant 0 : i32
    %c0_i32_0 = arith.constant 0 : i32
    return %arg0, %c0_i32 : i32, i32
  }
  func.func @transform_1(%arg0: i32) -> (i32, i32) {
    %c0_i32 = arith.constant 0 : i32
    %c0_i32_0 = arith.constant 0 : i32
    %c0_i32_1 = arith.constant 0 : i32
    return %c0_i32, %c0_i32_0 : i32, i32
  }
  func.func @transform_2(%arg0: i32) -> (i32, i32) {
    %c0_i32 = arith.constant 0 : i32
    %c0_i32_0 = arith.constant 0 : i32
    %c0_i32_1 = arith.constant 0 : i32
    return %c0_i32, %c0_i32_0 : i32, i32
  }
  func.func @transform_3(%arg0: i32) -> (i32, i32) {
    %c0_i32 = arith.constant 0 : i32
    %c0_i32_0 = arith.constant 0 : i32
    %c0_i32_1 = arith.constant 0 : i32
    return %c0_i32, %c0_i32_0 : i32, i32
  }
  func.func @transform_4(%arg0: i32) -> (i32, i32) {
    %c0_i32 = arith.constant 0 : i32
    %c0_i32_0 = arith.constant 0 : i32
    %c0_i32_1 = arith.constant 0 : i32
    return %c0_i32, %c0_i32_0 : i32, i32
  }
  func.func @transform_5(%arg0: i32) -> (i32, i32) {
    %c0_i32 = arith.constant 0 : i32
    %c0_i32_0 = arith.constant 0 : i32
    %c0_i32_1 = arith.constant 0 : i32
    return %c0_i32, %c0_i32_0 : i32, i32
  }
  func.func @transform_6(%arg0: i32) -> (i32, i32) {
    %c0_i32 = arith.constant 0 : i32
    %c0_i32_0 = arith.constant 0 : i32
    %c0_i32_1 = arith.constant 0 : i32
    return %c0_i32, %c0_i32_0 : i32, i32
  }
  func.func @transform_7(%arg0: i32) -> (i32, i32) {
    %c0_i32 = arith.constant 0 : i32
    %c0_i32_0 = arith.constant 0 : i32
    return %arg0, %c0_i32 : i32, i32
  }
}

module attributes {stable_mosaic.version = 11 : i64} {
  func.func @_mlp_kernel(%arg0: i32, %arg1: memref<256x16xf32, #tpu.memory_space<vmem>>, %arg2: memref<16x128xbf16, #tpu.memory_space<vmem>>, %arg3: memref<1x128xf32, #tpu.memory_space<vmem>>, %arg4: memref<128x128xbf16, #tpu.memory_space<vmem>>, %arg5: memref<1x128xf32, #tpu.memory_space<vmem>>, %arg6: memref<128x4xbf16, #tpu.memory_space<vmem>>, %arg7: memref<1x4xf32, #tpu.memory_space<vmem>>, %arg8: memref<256x4xf32, #tpu.memory_space<vmem>>) attributes {dimension_semantics = [#tpu.dimension_semantics<parallel>], iteration_bounds = array<i64: 2>, scalar_prefetch = 0 : i64, scratch_operands = 0 : i64, tpu.core_type = #tpu.core_type<tc>, window_params = [{transform_indices = @transform_0, window_bounds = array<i64: 256, 16>}, {pipeline_mode = #tpu.pipeline_mode<synchronous>, transform_indices = @transform_1, window_bounds = array<i64: 16, 128>}, {pipeline_mode = #tpu.pipeline_mode<synchronous>, transform_indices = @transform_2, window_bounds = array<i64: 1, 128>}, {pipeline_mode = #tpu.pipeline_mode<synchronous>, transform_indices = @transform_3, window_bounds = array<i64: 128, 128>}, {pipeline_mode = #tpu.pipeline_mode<synchronous>, transform_indices = @transform_4, window_bounds = array<i64: 1, 128>}, {pipeline_mode = #tpu.pipeline_mode<synchronous>, transform_indices = @transform_5, window_bounds = array<i64: 128, 4>}, {pipeline_mode = #tpu.pipeline_mode<synchronous>, transform_indices = @transform_6, window_bounds = array<i64: 1, 4>}, {transform_indices = @transform_7, window_bounds = array<i64: 256, 4>}]} {
    %c0 = arith.constant 0 : index
    %c0_0 = arith.constant 0 : index
    %0 = vector.load %arg1[%c0, %c0_0] : memref<256x16xf32, #tpu.memory_space<vmem>>, vector<256x16xf32>
    %c0_1 = arith.constant 0 : index
    %c0_2 = arith.constant 0 : index
    %1 = vector.load %arg2[%c0_1, %c0_2] : memref<16x128xbf16, #tpu.memory_space<vmem>>, vector<16x128xbf16>
    %c0_3 = arith.constant 0 : index
    %c0_4 = arith.constant 0 : index
    %2 = vector.load %arg3[%c0_3, %c0_4] : memref<1x128xf32, #tpu.memory_space<vmem>>, vector<1x128xf32>
    %3 = arith.truncf %0 : vector<256x16xf32> to vector<256x16xbf16>
    %cst = arith.constant dense<0.000000e+00> : vector<256x128xf32>
    %4 = tpu.matmul %3, %1, %cst {dimension_numbers = #tpu.dot_dimension_numbers<[1], [0], [0], [1], [0, 0, 1, 1], [], []>} : vector<256x16xbf16>, vector<16x128xbf16>, vector<256x128xf32> -> vector<256x128xf32>
    %5 = vector.broadcast %2 : vector<1x128xf32> to vector<256x128xf32>
    %6 = arith.addf %4, %5 : vector<256x128xf32>
    %cst_5 = arith.constant 0.000000e+00 : f32
    %7 = vector.broadcast %cst_5 : f32 to vector<256x128xf32>
    %8 = arith.cmpf oge, %6, %7 : vector<256x128xf32>
    %cst_6 = arith.constant 0.00999999977 : f32
    %9 = vector.broadcast %cst_6 : f32 to vector<256x128xf32>
    %10 = arith.mulf %9, %6 : vector<256x128xf32>
    %11 = arith.select %8, %6, %10 : vector<256x128xi1>, vector<256x128xf32>
    %c0_7 = arith.constant 0 : index
    %c0_8 = arith.constant 0 : index
    %12 = vector.load %arg4[%c0_7, %c0_8] : memref<128x128xbf16, #tpu.memory_space<vmem>>, vector<128x128xbf16>
    %c0_9 = arith.constant 0 : index
    %c0_10 = arith.constant 0 : index
    %13 = vector.load %arg5[%c0_9, %c0_10] : memref<1x128xf32, #tpu.memory_space<vmem>>, vector<1x128xf32>
    %14 = arith.truncf %11 : vector<256x128xf32> to vector<256x128xbf16>
    %cst_11 = arith.constant dense<0.000000e+00> : vector<256x128xf32>
    %15 = tpu.matmul %14, %12, %cst_11 {dimension_numbers = #tpu.dot_dimension_numbers<[1], [0], [0], [1], [0, 0, 1, 1], [], []>} : vector<256x128xbf16>, vector<128x128xbf16>, vector<256x128xf32> -> vector<256x128xf32>
    %16 = vector.broadcast %13 : vector<1x128xf32> to vector<256x128xf32>
    %17 = arith.addf %15, %16 : vector<256x128xf32>
    %cst_12 = arith.constant 0.000000e+00 : f32
    %18 = vector.broadcast %cst_12 : f32 to vector<256x128xf32>
    %19 = arith.cmpf oge, %17, %18 : vector<256x128xf32>
    %cst_13 = arith.constant 0.00999999977 : f32
    %20 = vector.broadcast %cst_13 : f32 to vector<256x128xf32>
    %21 = arith.mulf %20, %17 : vector<256x128xf32>
    %22 = arith.select %19, %17, %21 : vector<256x128xi1>, vector<256x128xf32>
    %c0_14 = arith.constant 0 : index
    %c0_15 = arith.constant 0 : index
    %23 = vector.load %arg6[%c0_14, %c0_15] : memref<128x4xbf16, #tpu.memory_space<vmem>>, vector<128x4xbf16>
    %c0_16 = arith.constant 0 : index
    %c0_17 = arith.constant 0 : index
    %24 = vector.load %arg7[%c0_16, %c0_17] : memref<1x4xf32, #tpu.memory_space<vmem>>, vector<1x4xf32>
    %25 = arith.truncf %22 : vector<256x128xf32> to vector<256x128xbf16>
    %cst_18 = arith.constant dense<0.000000e+00> : vector<256x4xf32>
    %26 = tpu.matmul %25, %23, %cst_18 {dimension_numbers = #tpu.dot_dimension_numbers<[1], [0], [0], [1], [0, 0, 1, 1], [], []>} : vector<256x128xbf16>, vector<128x4xbf16>, vector<256x4xf32> -> vector<256x4xf32>
    %27 = vector.broadcast %24 : vector<1x4xf32> to vector<256x4xf32>
    %28 = arith.addf %26, %27 : vector<256x4xf32>
    %c0_19 = arith.constant 0 : index
    %c0_20 = arith.constant 0 : index
    %29 = vector.load %arg8[%c0_19, %c0_20] : memref<256x4xf32, #tpu.memory_space<vmem>>, vector<256x4xf32>
    tpu.vector_store %arg8[%c0_19, %c0_20], %28 {strides = array<i32>} : memref<256x4xf32, #tpu.memory_space<vmem>>, vector<256x4xf32>,
    return
  }
  func.func @transform_0(%arg0: i32) -> (i32, i32) {
    %c0_i32 = arith.constant 0 : i32
    %c0_i32_0 = arith.constant 0 : i32
    return %arg0, %c0_i32 : i32, i32
  }
  func.func @transform_1(%arg0: i32) -> (i32, i32) {
    %c0_i32 = arith.constant 0 : i32
    %c0_i32_0 = arith.constant 0 : i32
    %c0_i32_1 = arith.constant 0 : i32
    return %c0_i32, %c0_i32_0 : i32, i32
  }
  func.func @transform_2(%arg0: i32) -> (i32, i32) {
    %c0_i32 = arith.constant 0 : i32
    %c0_i32_0 = arith.constant 0 : i32
    %c0_i32_1 = arith.constant 0 : i32
    return %c0_i32, %c0_i32_0 : i32, i32
  }
  func.func @transform_3(%arg0: i32) -> (i32, i32) {
    %c0_i32 = arith.constant 0 : i32
    %c0_i32_0 = arith.constant 0 : i32
    %c0_i32_1 = arith.constant 0 : i32
    return %c0_i32, %c0_i32_0 : i32, i32
  }
  func.func @transform_4(%arg0: i32) -> (i32, i32) {
    %c0_i32 = arith.constant 0 : i32
    %c0_i32_0 = arith.constant 0 : i32
    %c0_i32_1 = arith.constant 0 : i32
    return %c0_i32, %c0_i32_0 : i32, i32
  }
  func.func @transform_5(%arg0: i32) -> (i32, i32) {
    %c0_i32 = arith.constant 0 : i32
    %c0_i32_0 = arith.constant 0 : i32
    %c0_i32_1 = arith.constant 0 : i32
    return %c0_i32, %c0_i32_0 : i32, i32
  }
  func.func @transform_6(%arg0: i32) -> (i32, i32) {
    %c0_i32 = arith.constant 0 : i32
    %c0_i32_0 = arith.constant 0 : i32
    %c0_i32_1 = arith.constant 0 : i32
    return %c0_i32, %c0_i32_0 : i32, i32
  }
  func.func @transform_7(%arg0: i32) -> (i32, i32) {
    %c0_i32 = arith.constant 0 : i32
    %c0_i32_0 = arith.constant 0 : i32
    return %arg0, %c0_i32 : i32, i32
  }
}

</mosaic_0001>

<llo_original>
// kernel: tpu_custom_call.1
$region0: #{tpu_custom_call.1}
  #allocation0 [shape = 'u32[]', space=smem, size = 0x4, offset = 0x4, fixed_abs, tag = 'smem constant byte address 0x4 - core index']
  #allocation1 [shape = 'u32[144,128]{1,0:T(1,128)}', space=vmem, size = 0x12000, scoped, tag = 'internal scratch']
  %s0 = inlined_call_operand.vmem [shape: f32[512,16], index: 0, kind: input, shape index: {}]
  %s1 = inlined_call_operand.vmem [shape: bf16[16,128], index: 1, kind: input, shape index: {}]
  %s2 = inlined_call_operand.vmem [shape: f32[1,128], index: 2, kind: input, shape index: {}]
  %s3 = inlined_call_operand.vmem [shape: bf16[128,128], index: 3, kind: input, shape index: {}]
  %s4 = inlined_call_operand.vmem [shape: f32[1,128], index: 4, kind: input, shape index: {}]
  %s5 = inlined_call_operand.vmem [shape: bf16[128,4], index: 5, kind: input, shape index: {}]
  %s6 = inlined_call_operand.vmem [shape: f32[1,4], index: 6, kind: input, shape index: {}]
  %s7 = inlined_call_operand.vmem [shape: f32[512,4], index: 7, kind: output, shape index: {}]
  %s8 = sld [smem:[#allocation0]]
  $region61: #{tpu_custom_call.1} parent=0
    _
  %s10 = ssub.s32 1, %s8
  %s11 = scalar_select 0, %s10, %s8
  loop: start=0, step=1, limit=4
  $region2: #{tpu_custom_call.1} parent=0 // loop_pre_header
    _
  $region3: #{tpu_custom_call.1} parent=0 // loop_header
    %s13 = sphi 0, %s17
    %p14 = scmp.ge.s32.totalorder %s13, 4
    %s23 = sphi 0, %s25
    %s26 = sphi 0, %s23
    %s27 = sphi 0, %s26
    %s43 = sphi 0, %s27
    %s47 = sphi 0, %s47
    %s49 = sphi 0, %s47
    %s50 = sphi 0, %s49
    %s64 = sphi 0, %s50
    %s68 = sphi 0, %s68
    %s70 = sphi 0, %s68
    %s71 = sphi 0, %s70
    %s85 = sphi 0, %s71
    %s89 = sphi 0, %s89
    %s91 = sphi 0, %s89
    %s92 = sphi 0, %s91
    %s106 = sphi 0, %s92
    %s110 = sphi 0, %s110
    %s112 = sphi 0, %s110
    %s113 = sphi 0, %s112
    %s127 = sphi 0, %s113
    %s131 = sphi 0, %s131
    %s133 = sphi 0, %s131
    %s134 = sphi 0, %s133
    %s148 = sphi 0, %s134
    %s152 = sphi 0, %s152
    %s154 = sphi 0, %s152
    %s155 = sphi 0, %s154
    %s169 = sphi 0, %s155
    %s175 = sphi 0, %s177
    %s178 = sphi 0, %s175
    %s179 = sphi 0, %s178
    %s195 = sphi 0, %s179
  $region4: #{tpu_custom_call.1} parent=0 // loop_header_branch
    %16 = sbr.rel (%p14) target = $region8
  $region5: #{tpu_custom_call.1} parent=0 // loop_body
    %s18 = ssub.s32 %s13, 1
    %s19 = ssub.s32 %s13, 2
    %s20 = sadd.s32 %s13, 1
    %s21 = ssub.s32 %s13, %s20
    %p22 = scmp.eq.s32.totalorder %s21, 0
    %s24 = sadd.s32 %s23, 1
    %s25 = scalar_select %p22, %s23, %s24
    %p28 = pneg %p22
    %p29 = scmp.eq.s32.totalorder %s13, 1
    %p30 = por %p28, %p29
    %p31 = scmp.ne.s32.totalorder %s23, %s26
    %p32 = scmp.eq.s32.totalorder %s13, 0
    %p33 = por %p31, %p32
    %p34 = scmp.ne.s32.totalorder %s23, %s26
    %p35 = scmp.eq.s32.totalorder %s18, 1
    %p36 = por %p34, %p35
    %p37 = scmp.ne.s32.totalorder %s26, %s27
    %p38 = scmp.eq.s32.totalorder %s18, 0
    %p39 = por %p37, %p38
    %p40 = scmp.ne.s32.totalorder %s26, %s27
    %p41 = scmp.eq.s32.totalorder %s19, 1
    %p42 = por %p40, %p41
    %p44 = scmp.ne.s32.totalorder %s27, %s43
    %p45 = scmp.eq.s32.totalorder %s19, 0
    %p46 = por %p44, %p45
    %s48 = sadd.s32 %s47, 1
    %p51 = scmp.eq.s32.totalorder %s13, 1
    %p52 = scmp.ne.s32.totalorder %s47, %s49
    %p53 = scmp.eq.s32.totalorder %s13, 0
    %p54 = por %p52, %p53
    %p55 = scmp.ne.s32.totalorder %s47, %s49
    %p56 = scmp.eq.s32.totalorder %s18, 1
    %p57 = por %p55, %p56
    %p58 = scmp.ne.s32.totalorder %s49, %s50
    %p59 = scmp.eq.s32.totalorder %s18, 0
    %p60 = por %p58, %p59
    %p61 = scmp.ne.s32.totalorder %s49, %s50
    %p62 = scmp.eq.s32.totalorder %s19, 1
    %p63 = por %p61, %p62
    %p65 = scmp.ne.s32.totalorder %s50, %s64
    %p66 = scmp.eq.s32.totalorder %s19, 0
    %p67 = por %p65, %p66
    %s69 = sadd.s32 %s68, 1
    %p72 = scmp.eq.s32.totalorder %s13, 1
    %p73 = scmp.ne.s32.totalorder %s68, %s70
    %p74 = scmp.eq.s32.totalorder %s13, 0
    %p75 = por %p73, %p74
    %p76 = scmp.ne.s32.totalorder %s68, %s70
    %p77 = scmp.eq.s32.totalorder %s18, 1
    %p78 = por %p76, %p77
    %p79 = scmp.ne.s32.totalorder %s70, %s71
    %p80 = scmp.eq.s32.totalorder %s18, 0
    %p81 = por %p79, %p80
    %p82 = scmp.ne.s32.totalorder %s70, %s71
    %p83 = scmp.eq.s32.totalorder %s19, 1
    %p84 = por %p82, %p83
    %p86 = scmp.ne.s32.totalorder %s71, %s85
    %p87 = scmp.eq.s32.totalorder %s19, 0
    %p88 = por %p86, %p87
    %s90 = sadd.s32 %s89, 1
    %p93 = scmp.eq.s32.totalorder %s13, 1
    %p94 = scmp.ne.s32.totalorder %s89, %s91
    %p95 = scmp.eq.s32.totalorder %s13, 0
    %p96 = por %p94, %p95
    %p97 = scmp.ne.s32.totalorder %s89, %s91
    %p98 = scmp.eq.s32.totalorder %s18, 1
    %p99 = por %p97, %p98
    %p100 = scmp.ne.s32.totalorder %s91, %s92
    %p101 = scmp.eq.s32.totalorder %s18, 0
    %p102 = por %p100, %p101
    %p103 = scmp.ne.s32.totalorder %s91, %s92
    %p104 = scmp.eq.s32.totalorder %s19, 1
    %p105 = por %p103, %p104
    %p107 = scmp.ne.s32.totalorder %s92, %s106
    %p108 = scmp.eq.s32.totalorder %s19, 0
    %p109 = por %p107, %p108
    %s111 = sadd.s32 %s110, 1
    %p114 = scmp.eq.s32.totalorder %s13, 1
    %p115 = scmp.ne.s32.totalorder %s110, %s112
    %p116 = scmp.eq.s32.totalorder %s13, 0
    %p117 = por %p115, %p116
    %p118 = scmp.ne.s32.totalorder %s110, %s112
    %p119 = scmp.eq.s32.totalorder %s18, 1
    %p120 = por %p118, %p119
    %p121 = scmp.ne.s32.totalorder %s112, %s113
    %p122 = scmp.eq.s32.totalorder %s18, 0
    %p123 = por %p121, %p122
    %p124 = scmp.ne.s32.totalorder %s112, %s113
    %p125 = scmp.eq.s32.totalorder %s19, 1
    %p126 = por %p124, %p125
    %p128 = scmp.ne.s32.totalorder %s113, %s127
    %p129 = scmp.eq.s32.totalorder %s19, 0
    %p130 = por %p128, %p129
    %s132 = sadd.s32 %s131, 1
    %p135 = scmp.eq.s32.totalorder %s13, 1
    %p136 = scmp.ne.s32.totalorder %s131, %s133
    %p137 = scmp.eq.s32.totalorder %s13, 0
    %p138 = por %p136, %p137
    %p139 = scmp.ne.s32.totalorder %s131, %s133
    %p140 = scmp.eq.s32.totalorder %s18, 1
    %p141 = por %p139, %p140
    %p142 = scmp.ne.s32.totalorder %s133, %s134
    %p143 = scmp.eq.s32.totalorder %s18, 0
    %p144 = por %p142, %p143
    %p145 = scmp.ne.s32.totalorder %s133, %s134
    %p146 = scmp.eq.s32.totalorder %s19, 1
    %p147 = por %p145, %p146
    %p149 = scmp.ne.s32.totalorder %s134, %s148
    %p150 = scmp.eq.s32.totalorder %s19, 0
    %p151 = por %p149, %p150
    %s153 = sadd.s32 %s152, 1
    %p156 = scmp.eq.s32.totalorder %s13, 1
    %p157 = scmp.ne.s32.totalorder %s152, %s154
    %p158 = scmp.eq.s32.totalorder %s13, 0
    %p159 = por %p157, %p158
    %p160 = scmp.ne.s32.totalorder %s152, %s154
    %p161 = scmp.eq.s32.totalorder %s18, 1
    %p162 = por %p160, %p161
    %p163 = scmp.ne.s32.totalorder %s154, %s155
    %p164 = scmp.eq.s32.totalorder %s18, 0
    %p165 = por %p163, %p164
    %p166 = scmp.ne.s32.totalorder %s154, %s155
    %p167 = scmp.eq.s32.totalorder %s19, 1
    %p168 = por %p166, %p167
    %p170 = scmp.ne.s32.totalorder %s155, %s169
    %p171 = scmp.eq.s32.totalorder %s19, 0
    %p172 = por %p170, %p171
    %s173 = ssub.s32 %s13, %s20
    %p174 = scmp.eq.s32.totalorder %s173, 0
    %s176 = sadd.s32 %s175, 1
    %s177 = scalar_select %p174, %s175, %s176
    %p180 = pneg %p174
    %p181 = scmp.eq.s32.totalorder %s13, 1
    %p182 = por %p180, %p181
    %p183 = scmp.ne.s32.totalorder %s175, %s178
    %p184 = scmp.eq.s32.totalorder %s13, 0
    %p185 = por %p183, %p184
    %p186 = scmp.ne.s32.totalorder %s175, %s178
    %p187 = scmp.eq.s32.totalorder %s18, 1
    %p188 = por %p186, %p187
    %p189 = scmp.ne.s32.totalorder %s178, %s179
    %p190 = scmp.eq.s32.totalorder %s18, 0
    %p191 = por %p189, %p190
    %p192 = scmp.ne.s32.totalorder %s178, %s179
    %p193 = scmp.eq.s32.totalorder %s19, 1
    %p194 = por %p192, %p193
    %p196 = scmp.ne.s32.totalorder %s179, %s195
    %p197 = scmp.eq.s32.totalorder %s19, 0
    %p198 = por %p196, %p197
    %p199 = scmp.le.s32.totalorder 1, %s13
    %p200 = scmp.lt.s32.totalorder %s13, 3
    %p201 = pnand %p199, %p200
    %p202 = pneg %p201
    // Predicated region
    $region9: #{tpu_custom_call.1} parent=5 // pred_check
      _
    $region10: #{tpu_custom_call.1} parent=5 // pred_check_branch
      %204 = sbr.rel (%p201) target = $region12
    $region11: #{tpu_custom_call.1} parent=5 // pred_region
      %s205 = ssub.s32 %s13, 1
      // Predicated region
      $region13: #{tpu_custom_call.1} parent=11 // pred_check
        %p206 = pneg %p60
      $region14: #{tpu_custom_call.1} parent=11 // pred_check_branch
        %208 = sbr.rel (%p206) target = $region16
      $region15: #{tpu_custom_call.1} parent=11 // pred_region
        _
      $region16: #{tpu_custom_call.1} parent=11 // pred_fallthru
        _
      // Predicated region
      $region17: #{tpu_custom_call.1} parent=11 // pred_check
        %p209 = pneg %p81
      $region18: #{tpu_custom_call.1} parent=11 // pred_check_branch
        %211 = sbr.rel (%p209) target = $region20
      $region19: #{tpu_custom_call.1} parent=11 // pred_region
        _
      $region20: #{tpu_custom_call.1} parent=11 // pred_fallthru
        _
      // Predicated region
      $region21: #{tpu_custom_call.1} parent=11 // pred_check
        %p212 = pneg %p102
      $region22: #{tpu_custom_call.1} parent=11 // pred_check_branch
        %214 = sbr.rel (%p212) target = $region24
      $region23: #{tpu_custom_call.1} parent=11 // pred_region
        _
      $region24: #{tpu_custom_call.1} parent=11 // pred_fallthru
        _
      // Predicated region
      $region25: #{tpu_custom_call.1} parent=11 // pred_check
        %p215 = pneg %p123
      $region26: #{tpu_custom_call.1} parent=11 // pred_check_branch
        %217 = sbr.rel (%p215) target = $region28
      $region27: #{tpu_custom_call.1} parent=11 // pred_region
        _
      $region28: #{tpu_custom_call.1} parent=11 // pred_fallthru
        _
      // Predicated region
      $region29: #{tpu_custom_call.1} parent=11 // pred_check
        %p218 = pneg %p144
      $region30: #{tpu_custom_call.1} parent=11 // pred_check_branch
        %220 = sbr.rel (%p218) target = $region32
      $region31: #{tpu_custom_call.1} parent=11 // pred_region
        _
      $region32: #{tpu_custom_call.1} parent=11 // pred_fallthru
        _
      // Predicated region
      $region33: #{tpu_custom_call.1} parent=11 // pred_check
        %p221 = pneg %p165
      $region34: #{tpu_custom_call.1} parent=11 // pred_check_branch
        %223 = sbr.rel (%p221) target = $region36
      $region35: #{tpu_custom_call.1} parent=11 // pred_region
        _
      $region36: #{tpu_custom_call.1} parent=11 // pred_fallthru
        _
    $region12: #{tpu_custom_call.1} parent=5 // pred_fallthru
      _
    %p224 = scmp.lt.s32.totalorder %s13, 2
    // Predicated region
    $region37: #{tpu_custom_call.1} parent=5 // pred_check
      %p225 = pneg %p224
    $region38: #{tpu_custom_call.1} parent=5 // pred_check_branch
      %227 = sbr.rel (%p225) target = $region40
    $region39: #{tpu_custom_call.1} parent=5 // pred_region
      // Predicated region
      $region41: #{tpu_custom_call.1} parent=39 // pred_check
        %p228 = pneg %p33
      $region42: #{tpu_custom_call.1} parent=39 // pred_check_branch
        %230 = sbr.rel (%p228) target = $region44
      $region43: #{tpu_custom_call.1} parent=39 // pred_region
        %s231 = smul.u32 32, %s13
        %p232 = scmp.lt.s32.totalorder %s231, 63
        %s233 = scalar_select %p232, %s231, 63
        %s234 = smul.addr %s233, 8
        %s235 = scalar_lea.vmem %s0, %s234
        %s236 = smul.u32 32, %s13
      $region44: #{tpu_custom_call.1} parent=39 // pred_fallthru
        _
    $region40: #{tpu_custom_call.1} parent=5 // pred_fallthru
      _
    %p237 = scmp.le.s32.totalorder 1, %s13
    %p238 = scmp.lt.s32.totalorder %s13, 3
    %p239 = pnand %p237, %p238
    %p240 = pneg %p239
    // Predicated region
    $region45: #{tpu_custom_call.1} parent=5 // pred_check
      _
    $region46: #{tpu_custom_call.1} parent=5 // pred_check_branch
      %242 = sbr.rel (%p239) target = $region48
    $region47: #{tpu_custom_call.1} parent=5 // pred_region
      %s243 = ssub.s32 %s13, 1
      %s244 = smul.u32 32, %s18
      %p245 = scmp.lt.s32.totalorder %s244, 63
      %s246 = scalar_select %p245, %s244, 63
      %s247 = smul.addr %s246, 8
      %s248 = scalar_lea.vmem %s0, %s247
      %p249 = pneg %p39
      %p250 = pneg %p36
      %p251 = pneg %p60
      %p252 = pneg %p57
      %p253 = pneg %p81
      %p254 = pneg %p78
      %p255 = pneg %p102
      %p256 = pneg %p99
      %p257 = pneg %p123
      %p258 = pneg %p120
      %p259 = pneg %p144
      %p260 = pneg %p141
      %p261 = pneg %p165
      %p262 = pneg %p162
      %p263 = pneg %p191
      %p264 = pneg %p188
      %s265 = smul.u32 32, %s18
      %p266 = scmp.lt.s32.totalorder %s265, 63
      %s267 = scalar_select %p266, %s265, 63
      %s268 = smul.addr %s267, 8
      %s269 = scalar_lea.vmem %s7, %s268
      %s270 = smul.u32 32, %s18
      %p271 = scmp.lt.s32.totalorder %s270, 63
      %s272 = scalar_select %p271, %s270, 63
      %s273 = smul.addr %s272, 8
      %s274 = scalar_lea.vmem %s0, %s273
      %s275 = smul.u32 32, %s18
      %s276 = smul.u32 32, %s18
      %p277 = scmp.lt.s32.totalorder %s276, 63
      %s278 = scalar_select %p277, %s276, 63
      %s279 = smul.addr %s278, 8
      %s280 = scalar_lea.vmem %s7, %s279
      %s281 = smul.u32 32, %s18
      %v283 = vld [vmem:[%s274] sm:$0xff]
      %v284 = vld [vmem:[%s274 + $0x8] sm:$0xff]
      %v285 = vld [vmem:[%s274 + $0x10] sm:$0xff]
      %v286 = vld [vmem:[%s274 + $0x18] sm:$0xff]
      %v287 = vld [vmem:[%s274 + $0x20] sm:$0xff]
      %v288 = vld [vmem:[%s274 + $0x28] sm:$0xff]
      %v289 = vld [vmem:[%s274 + $0x30] sm:$0xff]
      %v290 = vld [vmem:[%s274 + $0x38] sm:$0xff]
      %v291 = vld [vmem:[%s274 + $0x40] sm:$0xff]
      %v292 = vld [vmem:[%s274 + $0x48] sm:$0xff]
      %v293 = vld [vmem:[%s274 + $0x50] sm:$0xff]
      %v294 = vld [vmem:[%s274 + $0x58] sm:$0xff]
      %v295 = vld [vmem:[%s274 + $0x60] sm:$0xff]
      %v296 = vld [vmem:[%s274 + $0x68] sm:$0xff]
      %v297 = vld [vmem:[%s274 + $0x70] sm:$0xff]
      %v298 = vld [vmem:[%s274 + $0x78] sm:$0xff]
      %v299 = vld [vmem:[%s274 + $0x80] sm:$0xff]
      %v300 = vld [vmem:[%s274 + $0x88] sm:$0xff]
      %v301 = vld [vmem:[%s274 + $0x90] sm:$0xff]
      %v302 = vld [vmem:[%s274 + $0x98] sm:$0xff]
      %v303 = vld [vmem:[%s274 + $0xa0] sm:$0xff]
      %v304 = vld [vmem:[%s274 + $0xa8] sm:$0xff]
      %v305 = vld [vmem:[%s274 + $0xb0] sm:$0xff]
      %v306 = vld [vmem:[%s274 + $0xb8] sm:$0xff]
      %v307 = vld [vmem:[%s274 + $0xc0] sm:$0xff]
      %v308 = vld [vmem:[%s274 + $0xc8] sm:$0xff]
      %v309 = vld [vmem:[%s274 + $0xd0] sm:$0xff]
      %v310 = vld [vmem:[%s274 + $0xd8] sm:$0xff]
      %v311 = vld [vmem:[%s274 + $0xe0] sm:$0xff]
      %v312 = vld [vmem:[%s274 + $0xe8] sm:$0xff]
      %v313 = vld [vmem:[%s274 + $0xf0] sm:$0xff]
      %v314 = vld [vmem:[%s274 + $0xf8] sm:$0xff]
      %v315 = vld [vmem:[%s1] sm:$0xf]
      %v316 = vld [vmem:[%s1 + $0x4] sm:$0xf]
      %v317 = vld [vmem:[%s2] sm:$0x1]
      %v318 = vpack.c.bf16 %v284, %v283
      %v319 = vpack.c.bf16 %v286, %v285
      %v320 = vpack.c.bf16 %v288, %v287
      %v321 = vpack.c.bf16 %v290, %v289
      %v322 = vpack.c.bf16 %v292, %v291
      %v323 = vpack.c.bf16 %v294, %v293
      %v324 = vpack.c.bf16 %v296, %v295
      %v325 = vpack.c.bf16 %v298, %v297
      %v326 = vpack.c.bf16 %v300, %v299
      %v327 = vpack.c.bf16 %v302, %v301
      %v328 = vpack.c.bf16 %v304, %v303
      %v329 = vpack.c.bf16 %v306, %v305
      %v330 = vpack.c.bf16 %v308, %v307
      %v331 = vpack.c.bf16 %v310, %v309
      %v332 = vpack.c.bf16 %v312, %v311
      %v333 = vpack.c.bf16 %v314, %v313
      %v335 = vlaneseq
      %v336 = vshrl.u32 %v335, 7
      %v337 = vsub.s32 0, %v336
      %v338 = vrot.slane %v317, %v337
      %v342 = vunpack.c.l.b16 %v315
      %v343 = vunpack.c.l.b16 %v316
      %v344 = vpack.c.b16 %v343, %v342
      %vm346 = vcmask 130048
      %v348 = vsel %vm346, %v318, 0
      %v351 = vsel %vm346, %v319, 0
      %v354 = vsel %vm346, %v320, 0
      %v357 = vsel %vm346, %v321, 0
      %v360 = vsel %vm346, %v322, 0
      %v363 = vsel %vm346, %v323, 0
      %v366 = vsel %vm346, %v324, 0
      %v369 = vsel %vm346, %v325, 0
      %v372 = vsel %vm346, %v326, 0
      %v375 = vsel %vm346, %v327, 0
      %v378 = vsel %vm346, %v328, 0
      %v381 = vsel %vm346, %v329, 0
      %v384 = vsel %vm346, %v330, 0
      %v387 = vsel %vm346, %v331, 0
      %v390 = vsel %vm346, %v332, 0
      %v393 = vsel %vm346, %v333, 0
      %395 = vmatprep.subr.bf16.mxu0 0
      %396 = vmatpush1.bf16.msra.mxu0 %v344
      %397 = vmatprep.subr.bf16.mxu0 0
      %398 = vmatpush1.bf16.msra.mxu0 0
      %399 = vmatprep.subr.bf16.mxu0 0
      %400 = vmatpush1.bf16.msra.mxu0 0
      %401 = vmatprep.subr.bf16.mxu0 0
      %402 = vmatpush1.bf16.msra.mxu0 0
      %403 = vmatprep.subr.bf16.mxu0 0
      %404 = vmatpush1.bf16.msra.mxu0 0
      %405 = vmatprep.subr.bf16.mxu0 0
      %406 = vmatpush1.bf16.msra.mxu0 0
      %407 = vmatprep.subr.bf16.mxu0 0
      %408 = vmatpush1.bf16.msra.mxu0 0
      %409 = vmatprep.subr.bf16.mxu0 0
      %410 = vmatpush1.bf16.msra.mxu0 0
      %411 = vmatprep.subr.bf16.mxu0 0
      %412 = vmatpush1.bf16.msra.mxu0 0
      %413 = vmatprep.subr.bf16.mxu0 0
      %414 = vmatpush1.bf16.msra.mxu0 0
      %415 = vmatprep.subr.bf16.mxu0 0
      %416 = vmatpush1.bf16.msra.mxu0 0
      %417 = vmatprep.subr.bf16.mxu0 0
      %418 = vmatpush1.bf16.msra.mxu0 0
      %419 = vmatprep.subr.bf16.mxu0 0
      %420 = vmatpush1.bf16.msra.mxu0 0
      %421 = vmatprep.subr.bf16.mxu0 0
      %422 = vmatpush1.bf16.msra.mxu0 0
      %423 = vmatprep.subr.bf16.mxu0 0
      %424 = vmatpush1.bf16.msra.mxu0 0
      %425 = vmatprep.subr.bf16.mxu0 0
      %426 = vmatpush1.bf16.msra.mxu0 0
      %427 = vmatprep.mubr.bf16.mxu0 0
      %428 = vmatmul.mubr.bf16.gmra.mrb[0].mxu0 %v348
      %v429 = vpop.f32.mrb[0].mxu0
      %v430 = vadd.f32 %v338, %v429
      %v431 = vpop.f32.mrb[0].mxu0
      %v432 = vpop.f32.mrb[0].mxu0
      %v433 = vadd.f32 %v338, %v432
      %v434 = vpop.f32.mrb[0].mxu0
      %435 = vmatprep.mubr.bf16.mxu0 0
      %436 = vmatmul.mubr.bf16.gmra.mrb[0].mxu0 %v351
      %v437 = vpop.f32.mrb[0].mxu0
      %v438 = vadd.f32 %v338, %v437
      %v439 = vpop.f32.mrb[0].mxu0
      %v440 = vpop.f32.mrb[0].mxu0
      %v441 = vadd.f32 %v338, %v440
      %v442 = vpop.f32.mrb[0].mxu0
      %443 = vmatprep.mubr.bf16.mxu0 0
      %444 = vmatmul.mubr.bf16.gmra.mrb[0].mxu0 %v354
      %v445 = vpop.f32.mrb[0].mxu0
      %v446 = vadd.f32 %v338, %v445
      %v447 = vpop.f32.mrb[0].mxu0
      %v448 = vpop.f32.mrb[0].mxu0
      %v449 = vadd.f32 %v338, %v448
      %v450 = vpop.f32.mrb[0].mxu0
      %451 = vmatprep.mubr.bf16.mxu0 0
      %452 = vmatmul.mubr.bf16.gmra.mrb[0].mxu0 %v357
      %v453 = vpop.f32.mrb[0].mxu0
      %v454 = vadd.f32 %v338, %v453
      %v455 = vpop.f32.mrb[0].mxu0
      %v456 = vpop.f32.mrb[0].mxu0
      %v457 = vadd.f32 %v338, %v456
      %v458 = vpop.f32.mrb[0].mxu0
      %459 = vmatprep.mubr.bf16.mxu0 0
      %460 = vmatmul.mubr.bf16.gmra.mrb[0].mxu0 %v360
      %v461 = vpop.f32.mrb[0].mxu0
      %v462 = vadd.f32 %v338, %v461
      %v463 = vpop.f32.mrb[0].mxu0
      %v464 = vpop.f32.mrb[0].mxu0
      %v465 = vadd.f32 %v338, %v464
      %v466 = vpop.f32.mrb[0].mxu0
      %467 = vmatprep.mubr.bf16.mxu0 0
      %468 = vmatmul.mubr.bf16.gmra.mrb[0].mxu0 %v363
      %v469 = vpop.f32.mrb[0].mxu0
      %v470 = vadd.f32 %v338, %v469
      %v471 = vpop.f32.mrb[0].mxu0
      %v472 = vpop.f32.mrb[0].mxu0
      %v473 = vadd.f32 %v338, %v472
      %v474 = vpop.f32.mrb[0].mxu0
      %475 = vmatprep.mubr.bf16.mxu0 0
      %476 = vmatmul.mubr.bf16.gmra.mrb[0].mxu0 %v366
      %v477 = vpop.f32.mrb[0].mxu0
      %v478 = vadd.f32 %v338, %v477
      %v479 = vpop.f32.mrb[0].mxu0
      %v480 = vpop.f32.mrb[0].mxu0
      %v481 = vadd.f32 %v338, %v480
      %v482 = vpop.f32.mrb[0].mxu0
      %483 = vmatprep.mubr.bf16.mxu0 0
      %484 = vmatmul.mubr.bf16.gmra.mrb[0].mxu0 %v369
      %v485 = vpop.f32.mrb[0].mxu0
      %v486 = vadd.f32 %v338, %v485
      %v487 = vpop.f32.mrb[0].mxu0
      %v488 = vpop.f32.mrb[0].mxu0
      %v489 = vadd.f32 %v338, %v488
      %v490 = vpop.f32.mrb[0].mxu0
      %491 = vmatprep.mubr.bf16.mxu0 0
      %492 = vmatmul.mubr.bf16.gmra.mrb[0].mxu0 %v372
      %v493 = vpop.f32.mrb[0].mxu0
      %v494 = vadd.f32 %v338, %v493
      %v495 = vpop.f32.mrb[0].mxu0
      %v496 = vpop.f32.mrb[0].mxu0
      %v497 = vadd.f32 %v338, %v496
      %v498 = vpop.f32.mrb[0].mxu0
      %499 = vmatprep.mubr.bf16.mxu0 0
      %500 = vmatmul.mubr.bf16.gmra.mrb[0].mxu0 %v375
      %v501 = vpop.f32.mrb[0].mxu0
      %v502 = vadd.f32 %v338, %v501
      %v503 = vpop.f32.mrb[0].mxu0
      %v504 = vpop.f32.mrb[0].mxu0
      %v505 = vadd.f32 %v338, %v504
      %v506 = vpop.f32.mrb[0].mxu0
      %507 = vmatprep.mubr.bf16.mxu0 0
      %508 = vmatmul.mubr.bf16.gmra.mrb[0].mxu0 %v378
      %v509 = vpop.f32.mrb[0].mxu0
      %v510 = vadd.f32 %v338, %v509
      %v511 = vpop.f32.mrb[0].mxu0
      %v512 = vpop.f32.mrb[0].mxu0
      %v513 = vadd.f32 %v338, %v512
      %v514 = vpop.f32.mrb[0].mxu0
      %515 = vmatprep.mubr.bf16.mxu0 0
      %516 = vmatmul.mubr.bf16.gmra.mrb[0].mxu0 %v381
      %v517 = vpop.f32.mrb[0].mxu0
      %v518 = vadd.f32 %v338, %v517
      %v519 = vpop.f32.mrb[0].mxu0
      %v520 = vpop.f32.mrb[0].mxu0
      %v521 = vadd.f32 %v338, %v520
      %v522 = vpop.f32.mrb[0].mxu0
      %523 = vmatprep.mubr.bf16.mxu0 0
      %524 = vmatmul.mubr.bf16.gmra.mrb[0].mxu0 %v384
      %v525 = vpop.f32.mrb[0].mxu0
      %v526 = vadd.f32 %v338, %v525
      %v527 = vpop.f32.mrb[0].mxu0
      %v528 = vpop.f32.mrb[0].mxu0
      %v529 = vadd.f32 %v338, %v528
      %v530 = vpop.f32.mrb[0].mxu0
      %531 = vmatprep.mubr.bf16.mxu0 0
      %532 = vmatmul.mubr.bf16.gmra.mrb[0].mxu0 %v387
      %v533 = vpop.f32.mrb[0].mxu0
      %v534 = vadd.f32 %v338, %v533
      %v535 = vpop.f32.mrb[0].mxu0
      %v536 = vpop.f32.mrb[0].mxu0
      %v537 = vadd.f32 %v338, %v536
      %v538 = vpop.f32.mrb[0].mxu0
      %539 = vmatprep.mubr.bf16.mxu0 0
      %540 = vmatmul.mubr.bf16.gmra.mrb[0].mxu0 %v390
      %v541 = vpop.f32.mrb[0].mxu0
      %v542 = vadd.f32 %v338, %v541
      %v543 = vpop.f32.mrb[0].mxu0
      %v544 = vpop.f32.mrb[0].mxu0
      %v545 = vadd.f32 %v338, %v544
      %v546 = vpop.f32.mrb[0].mxu0
      %547 = vmatprep.mubr.bf16.mxu0 0
      %548 = vmatmul.mubr.bf16.gmra.mrb[0].mxu0 %v393
      %v549 = vpop.f32.mrb[0].mxu0
      %v550 = vadd.f32 %v338, %v549
      %v551 = vpop.f32.mrb[0].mxu0
      %v552 = vpop.f32.mrb[0].mxu0
      %v553 = vadd.f32 %v338, %v552
      %v554 = vpop.f32.mrb[0].mxu0
      %555 = vdwg.mxu0
      %vm556 = vcmp.ge.f32.partialorder %v430, 0.0
      %vm557 = vcmp.ge.f32.partialorder %v433, 0.0
      %vm558 = vcmp.ge.f32.partialorder %v438, 0.0
      %vm559 = vcmp.ge.f32.partialorder %v441, 0.0
      %vm560 = vcmp.ge.f32.partialorder %v446, 0.0
      %vm561 = vcmp.ge.f32.partialorder %v449, 0.0
      %vm562 = vcmp.ge.f32.partialorder %v454, 0.0
      %vm563 = vcmp.ge.f32.partialorder %v457, 0.0
      %vm564 = vcmp.ge.f32.partialorder %v462, 0.0
      %vm565 = vcmp.ge.f32.partialorder %v465, 0.0
      %vm566 = vcmp.ge.f32.partialorder %v470, 0.0
      %vm567 = vcmp.ge.f32.partialorder %v473, 0.0
      %vm568 = vcmp.ge.f32.partialorder %v478, 0.0
      %vm569 = vcmp.ge.f32.partialorder %v481, 0.0
      %vm570 = vcmp.ge.f32.partialorder %v486, 0.0
      %vm571 = vcmp.ge.f32.partialorder %v489, 0.0
      %vm572 = vcmp.ge.f32.partialorder %v494, 0.0
      %vm573 = vcmp.ge.f32.partialorder %v497, 0.0
      %vm574 = vcmp.ge.f32.partialorder %v502, 0.0
      %vm575 = vcmp.ge.f32.partialorder %v505, 0.0
      %vm576 = vcmp.ge.f32.partialorder %v510, 0.0
      %vm577 = vcmp.ge.f32.partialorder %v513, 0.0
      %vm578 = vcmp.ge.f32.partialorder %v518, 0.0
      %vm579 = vcmp.ge.f32.partialorder %v521, 0.0
      %vm580 = vcmp.ge.f32.partialorder %v526, 0.0
      %vm581 = vcmp.ge.f32.partialorder %v529, 0.0
      %vm582 = vcmp.ge.f32.partialorder %v534, 0.0
      %vm583 = vcmp.ge.f32.partialorder %v537, 0.0
      %vm584 = vcmp.ge.f32.partialorder %v542, 0.0
      %vm585 = vcmp.ge.f32.partialorder %v545, 0.0
      %vm586 = vcmp.ge.f32.partialorder %v550, 0.0
      %vm587 = vcmp.ge.f32.partialorder %v553, 0.0
      %v588 = vmul.f32 %v430, 0.01
      %v589 = vmul.f32 %v433, 0.01
      %v590 = vmul.f32 %v438, 0.01
      %v591 = vmul.f32 %v441, 0.01
      %v592 = vmul.f32 %v446, 0.01
      %v593 = vmul.f32 %v449, 0.01
      %v594 = vmul.f32 %v454, 0.01
      %v595 = vmul.f32 %v457, 0.01
      %v596 = vmul.f32 %v462, 0.01
      %v597 = vmul.f32 %v465, 0.01
      %v598 = vmul.f32 %v470, 0.01
      %v599 = vmul.f32 %v473, 0.01
      %v600 = vmul.f32 %v478, 0.01
      %v601 = vmul.f32 %v481, 0.01
      %v602 = vmul.f32 %v486, 0.01
      %v603 = vmul.f32 %v489, 0.01
      %v604 = vmul.f32 %v494, 0.01
      %v605 = vmul.f32 %v497, 0.01
      %v606 = vmul.f32 %v502, 0.01
      %v607 = vmul.f32 %v505, 0.01
      %v608 = vmul.f32 %v510, 0.01
      %v609 = vmul.f32 %v513, 0.01
      %v610 = vmul.f32 %v518, 0.01
      %v611 = vmul.f32 %v521, 0.01
      %v612 = vmul.f32 %v526, 0.01
      %v613 = vmul.f32 %v529, 0.01
      %v614 = vmul.f32 %v534, 0.01
      %v615 = vmul.f32 %v537, 0.01
      %v616 = vmul.f32 %v542, 0.01
      %v617 = vmul.f32 %v545, 0.01
      %v618 = vmul.f32 %v550, 0.01
      %v619 = vmul.f32 %v553, 0.01
      %v620 = vsel %vm556, %v430, %v588
      %v621 = vsel %vm557, %v433, %v589
      %v622 = vsel %vm558, %v438, %v590
      %v623 = vsel %vm559, %v441, %v591
      %v624 = vsel %vm560, %v446, %v592
      %v625 = vsel %vm561, %v449, %v593
      %v626 = vsel %vm562, %v454, %v594
      %v627 = vsel %vm563, %v457, %v595
      %v628 = vsel %vm564, %v462, %v596
      %v629 = vsel %vm565, %v465, %v597
      %v630 = vsel %vm566, %v470, %v598
      %v631 = vsel %vm567, %v473, %v599
      %v632 = vsel %vm568, %v478, %v600
      %v633 = vsel %vm569, %v481, %v601
      %v634 = vsel %vm570, %v486, %v602
      %v635 = vsel %vm571, %v489, %v603
      %v636 = vsel %vm572, %v494, %v604
      %v637 = vsel %vm573, %v497, %v605
      %v638 = vsel %vm574, %v502, %v606
      %v639 = vsel %vm575, %v505, %v607
      %v640 = vsel %vm576, %v510, %v608
      %v641 = vsel %vm577, %v513, %v609
      %v642 = vsel %vm578, %v518, %v610
      %v643 = vsel %vm579, %v521, %v611
      %v644 = vsel %vm580, %v526, %v612
      %v645 = vsel %vm581, %v529, %v613
      %v646 = vsel %vm582, %v534, %v614
      %v647 = vsel %vm583, %v537, %v615
      %v648 = vsel %vm584, %v542, %v616
      %v649 = vsel %vm585, %v545, %v617
      %v650 = vsel %vm586, %v550, %v618
      %v651 = vsel %vm587, %v553, %v619
      %v652 = vld [vmem:[%s3] sm:$0xf]
      %v653 = vld [vmem:[%s3 + $0x4] sm:$0xf]
      %v654 = vld [vmem:[%s3 + $0x8] sm:$0xf]
      %v655 = vld [vmem:[%s3 + $0xc] sm:$0xf]
      %v656 = vld [vmem:[%s3 + $0x10] sm:$0xf]
      %v657 = vld [vmem:[%s3 + $0x14] sm:$0xf]
      %v658 = vld [vmem:[%s3 + $0x18] sm:$0xf]
      %v659 = vld [vmem:[%s3 + $0x1c] sm:$0xf]
      %v660 = vld [vmem:[%s3 + $0x20] sm:$0xf]
      %v661 = vld [vmem:[%s3 + $0x24] sm:$0xf]
      %v662 = vld [vmem:[%s3 + $0x28] sm:$0xf]
      %v663 = vld [vmem:[%s3 + $0x2c] sm:$0xf]
      %v664 = vld [vmem:[%s3 + $0x30] sm:$0xf]
      %v665 = vld [vmem:[%s3 + $0x34] sm:$0xf]
      %v666 = vld [vmem:[%s3 + $0x38] sm:$0xf]
      %v667 = vld [vmem:[%s3 + $0x3c] sm:$0xf]
      %v668 = vld [vmem:[%s4] sm:$0x1]
      %v669 = vpack.c.bf16 %v621, %v620
      %v670 = vpack.c.bf16 %v623, %v622
      %v671 = vpack.c.bf16 %v625, %v624
      %v672 = vpack.c.bf16 %v627, %v626
      %v673 = vpack.c.bf16 %v629, %v628
      %v674 = vpack.c.bf16 %v631, %v630
      %v675 = vpack.c.bf16 %v633, %v632
      %v676 = vpack.c.bf16 %v635, %v634
      %v677 = vpack.c.bf16 %v637, %v636
      %v678 = vpack.c.bf16 %v639, %v638
      %v679 = vpack.c.bf16 %v641, %v640
      %v680 = vpack.c.bf16 %v643, %v642
      %v681 = vpack.c.bf16 %v645, %v644
      %v682 = vpack.c.bf16 %v647, %v646
      %v683 = vpack.c.bf16 %v649, %v648
      %v684 = vpack.c.bf16 %v651, %v650
      %v686 = vlaneseq
      %v687 = vshrl.u32 %v686, 7
      %v688 = vsub.s32 0, %v687
      %v689 = vrot.slane %v668, %v688
      %v707 = vunpack.c.l.b16 %v652
      %v708 = vunpack.c.l.b16 %v653
      %v709 = vunpack.c.l.b16 %v654
      %v710 = vunpack.c.l.b16 %v655
      %v711 = vunpack.c.l.b16 %v656
      %v712 = vunpack.c.l.b16 %v657
      %v713 = vunpack.c.l.b16 %v658
      %v714 = vunpack.c.l.b16 %v659
      %v715 = vunpack.c.l.b16 %v660
      %v716 = vunpack.c.l.b16 %v661
      %v717 = vunpack.c.l.b16 %v662
      %v718 = vunpack.c.l.b16 %v663
      %v719 = vunpack.c.l.b16 %v664
      %v720 = vunpack.c.l.b16 %v665
      %v721 = vunpack.c.l.b16 %v666
      %v722 = vunpack.c.l.b16 %v667
      %v723 = vpack.c.b16 %v708, %v707
      %v724 = vpack.c.b16 %v710, %v709
      %v725 = vpack.c.b16 %v712, %v711
      %v726 = vpack.c.b16 %v714, %v713
      %v727 = vpack.c.b16 %v716, %v715
      %v728 = vpack.c.b16 %v718, %v717
      %v729 = vpack.c.b16 %v720, %v719
      %v730 = vpack.c.b16 %v722, %v721
      %739 = vmatprep.subr.bf16.mxu0 0
      %740 = vmatpush1.bf16.msra.mxu0 %v723
      %741 = vmatprep.subr.bf16.mxu0 0
      %742 = vmatpush1.bf16.msra.mxu0 %v724
      %743 = vmatprep.subr.bf16.mxu0 0
      %744 = vmatpush1.bf16.msra.mxu0 %v725
      %745 = vmatprep.subr.bf16.mxu0 0
      %746 = vmatpush1.bf16.msra.mxu0 %v726
      %747 = vmatprep.subr.bf16.mxu0 0
      %748 = vmatpush1.bf16.msra.mxu0 %v727
      %749 = vmatprep.subr.bf16.mxu0 0
      %750 = vmatpush1.bf16.msra.mxu0 %v728
      %751 = vmatprep.subr.bf16.mxu0 0
      %752 = vmatpush1.bf16.msra.mxu0 %v729
      %753 = vmatprep.subr.bf16.mxu0 0
      %754 = vmatpush1.bf16.msra.mxu0 %v730
      %755 = vmatprep.subr.bf16.mxu0 0
      %756 = vmatpush1.bf16.msra.mxu0 0
      %757 = vmatprep.subr.bf16.mxu0 0
      %758 = vmatpush1.bf16.msra.mxu0 0
      %759 = vmatprep.subr.bf16.mxu0 0
      %760 = vmatpush1.bf16.msra.mxu0 0
      %761 = vmatprep.subr.bf16.mxu0 0
      %762 = vmatpush1.bf16.msra.mxu0 0
      %763 = vmatprep.subr.bf16.mxu0 0
      %764 = vmatpush1.bf16.msra.mxu0 0
      %765 = vmatprep.subr.bf16.mxu0 0
      %766 = vmatpush1.bf16.msra.mxu0 0
      %767 = vmatprep.subr.bf16.mxu0 0
      %768 = vmatpush1.bf16.msra.mxu0 0
      %769 = vmatprep.subr.bf16.mxu0 0
      %770 = vmatpush1.bf16.msra.mxu0 0
      %771 = vmatprep.mubr.bf16.mxu0 0
      %772 = vmatmul.mubr.bf16.gmra.mrb[0].mxu0 %v669
      %v773 = vpop.f32.mrb[0].mxu0
      %v774 = vadd.f32 %v689, %v773
      %v775 = vpop.f32.mrb[0].mxu0
      %v776 = vpop.f32.mrb[0].mxu0
      %v777 = vadd.f32 %v689, %v776
      %v778 = vpop.f32.mrb[0].mxu0
      %779 = vmatprep.mubr.bf16.mxu0 0
      %780 = vmatmul.mubr.bf16.gmra.mrb[0].mxu0 %v670
      %v781 = vpop.f32.mrb[0].mxu0
      %v782 = vadd.f32 %v689, %v781
      %v783 = vpop.f32.mrb[0].mxu0
      %v784 = vpop.f32.mrb[0].mxu0
      %v785 = vadd.f32 %v689, %v784
      %v786 = vpop.f32.mrb[0].mxu0
      %787 = vmatprep.mubr.bf16.mxu0 0
      %788 = vmatmul.mubr.bf16.gmra.mrb[0].mxu0 %v671
      %v789 = vpop.f32.mrb[0].mxu0
      %v790 = vadd.f32 %v689, %v789
      %v791 = vpop.f32.mrb[0].mxu0
      %v792 = vpop.f32.mrb[0].mxu0
      %v793 = vadd.f32 %v689, %v792
      %v794 = vpop.f32.mrb[0].mxu0
      %795 = vmatprep.mubr.bf16.mxu0 0
      %796 = vmatmul.mubr.bf16.gmra.mrb[0].mxu0 %v672
      %v797 = vpop.f32.mrb[0].mxu0
      %v798 = vadd.f32 %v689, %v797
      %v799 = vpop.f32.mrb[0].mxu0
      %v800 = vpop.f32.mrb[0].mxu0
      %v801 = vadd.f32 %v689, %v800
      %v802 = vpop.f32.mrb[0].mxu0
      %803 = vmatprep.mubr.bf16.mxu0 0
      %804 = vmatmul.mubr.bf16.gmra.mrb[0].mxu0 %v673
      %v805 = vpop.f32.mrb[0].mxu0
      %v806 = vadd.f32 %v689, %v805
      %v807 = vpop.f32.mrb[0].mxu0
      %v808 = vpop.f32.mrb[0].mxu0
      %v809 = vadd.f32 %v689, %v808
      %v810 = vpop.f32.mrb[0].mxu0
      %811 = vmatprep.mubr.bf16.mxu0 0
      %812 = vmatmul.mubr.bf16.gmra.mrb[0].mxu0 %v674
      %v813 = vpop.f32.mrb[0].mxu0
      %v814 = vadd.f32 %v689, %v813
      %v815 = vpop.f32.mrb[0].mxu0
      %v816 = vpop.f32.mrb[0].mxu0
      %v817 = vadd.f32 %v689, %v816
      %v818 = vpop.f32.mrb[0].mxu0
      %819 = vmatprep.mubr.bf16.mxu0 0
      %820 = vmatmul.mubr.bf16.gmra.mrb[0].mxu0 %v675
      %v821 = vpop.f32.mrb[0].mxu0
      %v822 = vadd.f32 %v689, %v821
      %v823 = vpop.f32.mrb[0].mxu0
      %v824 = vpop.f32.mrb[0].mxu0
      %v825 = vadd.f32 %v689, %v824
      %v826 = vpop.f32.mrb[0].mxu0
      %827 = vmatprep.mubr.bf16.mxu0 0
      %828 = vmatmul.mubr.bf16.gmra.mrb[0].mxu0 %v676
      %v829 = vpop.f32.mrb[0].mxu0
      %v830 = vadd.f32 %v689, %v829
      %v831 = vpop.f32.mrb[0].mxu0
      %v832 = vpop.f32.mrb[0].mxu0
      %v833 = vadd.f32 %v689, %v832
      %v834 = vpop.f32.mrb[0].mxu0
      %835 = vmatprep.mubr.bf16.mxu0 0
      %836 = vmatmul.mubr.bf16.gmra.mrb[0].mxu0 %v677
      %v837 = vpop.f32.mrb[0].mxu0
      %v838 = vadd.f32 %v689, %v837
      %v839 = vpop.f32.mrb[0].mxu0
      %v840 = vpop.f32.mrb[0].mxu0
      %v841 = vadd.f32 %v689, %v840
      %v842 = vpop.f32.mrb[0].mxu0
      %843 = vmatprep.mubr.bf16.mxu0 0
      %844 = vmatmul.mubr.bf16.gmra.mrb[0].mxu0 %v678
      %v845 = vpop.f32.mrb[0].mxu0
      %v846 = vadd.f32 %v689, %v845
      %v847 = vpop.f32.mrb[0].mxu0
      %v848 = vpop.f32.mrb[0].mxu0
      %v849 = vadd.f32 %v689, %v848
      %v850 = vpop.f32.mrb[0].mxu0
      %851 = vmatprep.mubr.bf16.mxu0 0
      %852 = vmatmul.mubr.bf16.gmra.mrb[0].mxu0 %v679
      %v853 = vpop.f32.mrb[0].mxu0
      %v854 = vadd.f32 %v689, %v853
      %v855 = vpop.f32.mrb[0].mxu0
      %v856 = vpop.f32.mrb[0].mxu0
      %v857 = vadd.f32 %v689, %v856
      %v858 = vpop.f32.mrb[0].mxu0
      %859 = vmatprep.mubr.bf16.mxu0 0
      %860 = vmatmul.mubr.bf16.gmra.mrb[0].mxu0 %v680
      %v861 = vpop.f32.mrb[0].mxu0
      %v862 = vadd.f32 %v689, %v861
      %v863 = vpop.f32.mrb[0].mxu0
      %v864 = vpop.f32.mrb[0].mxu0
      %v865 = vadd.f32 %v689, %v864
      %v866 = vpop.f32.mrb[0].mxu0
      %867 = vmatprep.mubr.bf16.mxu0 0
      %868 = vmatmul.mubr.bf16.gmra.mrb[0].mxu0 %v681
      %v869 = vpop.f32.mrb[0].mxu0
      %v870 = vadd.f32 %v689, %v869
      %v871 = vpop.f32.mrb[0].mxu0
      %v872 = vpop.f32.mrb[0].mxu0
      %v873 = vadd.f32 %v689, %v872
      %v874 = vpop.f32.mrb[0].mxu0
      %875 = vmatprep.mubr.bf16.mxu0 0
      %876 = vmatmul.mubr.bf16.gmra.mrb[0].mxu0 %v682
      %v877 = vpop.f32.mrb[0].mxu0
      %v878 = vadd.f32 %v689, %v877
      %v879 = vpop.f32.mrb[0].mxu0
      %v880 = vpop.f32.mrb[0].mxu0
      %v881 = vadd.f32 %v689, %v880
      %v882 = vpop.f32.mrb[0].mxu0
      %883 = vmatprep.mubr.bf16.mxu0 0
      %884 = vmatmul.mubr.bf16.gmra.mrb[0].mxu0 %v683
      %v885 = vpop.f32.mrb[0].mxu0
      %v886 = vadd.f32 %v689, %v885
      %v887 = vpop.f32.mrb[0].mxu0
      %v888 = vpop.f32.mrb[0].mxu0
      %v889 = vadd.f32 %v689, %v888
      %v890 = vpop.f32.mrb[0].mxu0
      %891 = vmatprep.mubr.bf16.mxu0 0
      %892 = vmatmul.mubr.bf16.gmra.mrb[0].mxu0 %v684
      %v893 = vpop.f32.mrb[0].mxu0
      %v894 = vadd.f32 %v689, %v893
      %v895 = vpop.f32.mrb[0].mxu0
      %v896 = vpop.f32.mrb[0].mxu0
      %v897 = vadd.f32 %v689, %v896
      %v898 = vpop.f32.mrb[0].mxu0
      %899 = vdwg.mxu0
      %vm900 = vcmp.ge.f32.partialorder %v774, 0.0
      %vm901 = vcmp.ge.f32.partialorder %v777, 0.0
      %vm902 = vcmp.ge.f32.partialorder %v782, 0.0
      %vm903 = vcmp.ge.f32.partialorder %v785, 0.0
      %vm904 = vcmp.ge.f32.partialorder %v790, 0.0
      %vm905 = vcmp.ge.f32.partialorder %v793, 0.0
      %vm906 = vcmp.ge.f32.partialorder %v798, 0.0
      %vm907 = vcmp.ge.f32.partialorder %v801, 0.0
      %vm908 = vcmp.ge.f32.partialorder %v806, 0.0
      %vm909 = vcmp.ge.f32.partialorder %v809, 0.0
      %vm910 = vcmp.ge.f32.partialorder %v814, 0.0
      %vm911 = vcmp.ge.f32.partialorder %v817, 0.0
      %vm912 = vcmp.ge.f32.partialorder %v822, 0.0
      %vm913 = vcmp.ge.f32.partialorder %v825, 0.0
      %vm914 = vcmp.ge.f32.partialorder %v830, 0.0
      %vm915 = vcmp.ge.f32.partialorder %v833, 0.0
      %vm916 = vcmp.ge.f32.partialorder %v838, 0.0
      %vm917 = vcmp.ge.f32.partialorder %v841, 0.0
      %vm918 = vcmp.ge.f32.partialorder %v846, 0.0
      %vm919 = vcmp.ge.f32.partialorder %v849, 0.0
      %vm920 = vcmp.ge.f32.partialorder %v854, 0.0
      %vm921 = vcmp.ge.f32.partialorder %v857, 0.0
      %vm922 = vcmp.ge.f32.partialorder %v862, 0.0
      %vm923 = vcmp.ge.f32.partialorder %v865, 0.0
      %vm924 = vcmp.ge.f32.partialorder %v870, 0.0
      %vm925 = vcmp.ge.f32.partialorder %v873, 0.0
      %vm926 = vcmp.ge.f32.partialorder %v878, 0.0
      %vm927 = vcmp.ge.f32.partialorder %v881, 0.0
      %vm928 = vcmp.ge.f32.partialorder %v886, 0.0
      %vm929 = vcmp.ge.f32.partialorder %v889, 0.0
      %vm930 = vcmp.ge.f32.partialorder %v894, 0.0
      %vm931 = vcmp.ge.f32.partialorder %v897, 0.0
      %v932 = vmul.f32 %v774, 0.01
      %v933 = vmul.f32 %v777, 0.01
      %v934 = vmul.f32 %v782, 0.01
      %v935 = vmul.f32 %v785, 0.01
      %v936 = vmul.f32 %v790, 0.01
      %v937 = vmul.f32 %v793, 0.01
      %v938 = vmul.f32 %v798, 0.01
      %v939 = vmul.f32 %v801, 0.01
      %v940 = vmul.f32 %v806, 0.01
      %v941 = vmul.f32 %v809, 0.01
      %v942 = vmul.f32 %v814, 0.01
      %v943 = vmul.f32 %v817, 0.01
      %v944 = vmul.f32 %v822, 0.01
      %v945 = vmul.f32 %v825, 0.01
      %v946 = vmul.f32 %v830, 0.01
      %v947 = vmul.f32 %v833, 0.01
      %v948 = vmul.f32 %v838, 0.01
      %v949 = vmul.f32 %v841, 0.01
      %v950 = vmul.f32 %v846, 0.01
      %v951 = vmul.f32 %v849, 0.01
      %v952 = vmul.f32 %v854, 0.01
      %v953 = vmul.f32 %v857, 0.01
      %v954 = vmul.f32 %v862, 0.01
      %v955 = vmul.f32 %v865, 0.01
      %v956 = vmul.f32 %v870, 0.01
      %v957 = vmul.f32 %v873, 0.01
      %v958 = vmul.f32 %v878, 0.01
      %v959 = vmul.f32 %v881, 0.01
      %v960 = vmul.f32 %v886, 0.01
      %v961 = vmul.f32 %v889, 0.01
      %v962 = vmul.f32 %v894, 0.01
      %v963 = vmul.f32 %v897, 0.01
      %v964 = vsel %vm900, %v774, %v932
      %v965 = vsel %vm901, %v777, %v933
      %v966 = vsel %vm902, %v782, %v934
      %v967 = vsel %vm903, %v785, %v935
      %v968 = vsel %vm904, %v790, %v936
      %v969 = vsel %vm905, %v793, %v937
      %v970 = vsel %vm906, %v798, %v938
      %v971 = vsel %vm907, %v801, %v939
      %v972 = vsel %vm908, %v806, %v940
      %v973 = vsel %vm909, %v809, %v941
      %v974 = vsel %vm910, %v814, %v942
      %v975 = vsel %vm911, %v817, %v943
      %v976 = vsel %vm912, %v822, %v944
      %v977 = vsel %vm913, %v825, %v945
      %v978 = vsel %vm914, %v830, %v946
      %v979 = vsel %vm915, %v833, %v947
      %v980 = vsel %vm916, %v838, %v948
      %v981 = vsel %vm917, %v841, %v949
      %v982 = vsel %vm918, %v846, %v950
      %v983 = vsel %vm919, %v849, %v951
      %v984 = vsel %vm920, %v854, %v952
      %v985 = vsel %vm921, %v857, %v953
      %v986 = vsel %vm922, %v862, %v954
      %v987 = vsel %vm923, %v865, %v955
      %v988 = vsel %vm924, %v870, %v956
      %v989 = vsel %vm925, %v873, %v957
      %v990 = vsel %vm926, %v878, %v958
      %v991 = vsel %vm927, %v881, %v959
      %v992 = vsel %vm928, %v886, %v960
      %v993 = vsel %vm929, %v889, %v961
      %v994 = vsel %vm930, %v894, %v962
      %v995 = vsel %vm931, %v897, %v963
      %v996 = vld [vmem:[%s5] sm:$0xf]
      %v997 = vld [vmem:[%s5 + $0x4] sm:$0xf]
      %v998 = vld [vmem:[%s5 + $0x8] sm:$0xf]
      %v999 = vld [vmem:[%s5 + $0xc] sm:$0xf]
      %v1000 = vld [vmem:[%s5 + $0x10] sm:$0xf]
      %v1001 = vld [vmem:[%s5 + $0x14] sm:$0xf]
      %v1002 = vld [vmem:[%s5 + $0x18] sm:$0xf]
      %v1003 = vld [vmem:[%s5 + $0x1c] sm:$0xf]
      %v1004 = vld [vmem:[%s5 + $0x20] sm:$0xf]
      %v1005 = vld [vmem:[%s5 + $0x24] sm:$0xf]
      %v1006 = vld [vmem:[%s5 + $0x28] sm:$0xf]
      %v1007 = vld [vmem:[%s5 + $0x2c] sm:$0xf]
      %v1008 = vld [vmem:[%s5 + $0x30] sm:$0xf]
      %v1009 = vld [vmem:[%s5 + $0x34] sm:$0xf]
      %v1010 = vld [vmem:[%s5 + $0x38] sm:$0xf]
      %v1011 = vld [vmem:[%s5 + $0x3c] sm:$0xf]
      %v1012 = vld [vmem:[%s6] sm:$0x1]
      %v1013 = vpack.c.bf16 %v965, %v964
      %v1014 = vpack.c.bf16 %v967, %v966
      %v1015 = vpack.c.bf16 %v969, %v968
      %v1016 = vpack.c.bf16 %v971, %v970
      %v1017 = vpack.c.bf16 %v973, %v972
      %v1018 = vpack.c.bf16 %v975, %v974
      %v1019 = vpack.c.bf16 %v977, %v976
      %v1020 = vpack.c.bf16 %v979, %v978
      %v1021 = vpack.c.bf16 %v981, %v980
      %v1022 = vpack.c.bf16 %v983, %v982
      %v1023 = vpack.c.bf16 %v985, %v984
      %v1024 = vpack.c.bf16 %v987, %v986
      %v1025 = vpack.c.bf16 %v989, %v988
      %v1026 = vpack.c.bf16 %v991, %v990
      %v1027 = vpack.c.bf16 %v993, %v992
      %v1028 = vpack.c.bf16 %v995, %v994
      %v1030 = vlaneseq
      %v1031 = vshrl.u32 %v1030, 7
      %v1032 = vsub.s32 0, %v1031
      %v1033 = vrot.slane %v1012, %v1032
      %v1051 = vunpack.c.l.b16 %v996
      %v1052 = vunpack.c.l.b16 %v997
      %v1053 = vunpack.c.l.b16 %v998
      %v1054 = vunpack.c.l.b16 %v999
      %v1055 = vunpack.c.l.b16 %v1000
      %v1056 = vunpack.c.l.b16 %v1001
      %v1057 = vunpack.c.l.b16 %v1002
      %v1058 = vunpack.c.l.b16 %v1003
      %v1059 = vunpack.c.l.b16 %v1004
      %v1060 = vunpack.c.l.b16 %v1005
      %v1061 = vunpack.c.l.b16 %v1006
      %v1062 = vunpack.c.l.b16 %v1007
      %v1063 = vunpack.c.l.b16 %v1008
      %v1064 = vunpack.c.l.b16 %v1009
      %v1065 = vunpack.c.l.b16 %v1010
      %v1066 = vunpack.c.l.b16 %v1011
      %v1067 = vpack.c.b16 %v1052, %v1051
      %v1068 = vpack.c.b16 %v1054, %v1053
      %v1069 = vpack.c.b16 %v1056, %v1055
      %v1070 = vpack.c.b16 %v1058, %v1057
      %v1071 = vpack.c.b16 %v1060, %v1059
      %v1072 = vpack.c.b16 %v1062, %v1061
      %v1073 = vpack.c.b16 %v1064, %v1063
      %v1074 = vpack.c.b16 %v1066, %v1065
      %1083 = vmatprep.subr.bf16.mxu0 0
      %1084 = vmatpush1.bf16.msra.mxu0 %v1067
      %1085 = vmatprep.subr.bf16.mxu0 0
      %1086 = vmatpush1.bf16.msra.mxu0 %v1068
      %1087 = vmatprep.subr.bf16.mxu0 0
      %1088 = vmatpush1.bf16.msra.mxu0 %v1069
      %1089 = vmatprep.subr.bf16.mxu0 0
      %1090 = vmatpush1.bf16.msra.mxu0 %v1070
      %1091 = vmatprep.subr.bf16.mxu0 0
      %1092 = vmatpush1.bf16.msra.mxu0 %v1071
      %1093 = vmatprep.subr.bf16.mxu0 0
      %1094 = vmatpush1.bf16.msra.mxu0 %v1072
      %1095 = vmatprep.subr.bf16.mxu0 0
      %1096 = vmatpush1.bf16.msra.mxu0 %v1073
      %1097 = vmatprep.subr.bf16.mxu0 0
      %1098 = vmatpush1.bf16.msra.mxu0 %v1074
      %1099 = vmatprep.subr.bf16.mxu0 0
      %1100 = vmatpush1.bf16.msra.mxu0 0
      %1101 = vmatprep.subr.bf16.mxu0 0
      %1102 = vmatpush1.bf16.msra.mxu0 0
      %1103 = vmatprep.subr.bf16.mxu0 0
      %1104 = vmatpush1.bf16.msra.mxu0 0
      %1105 = vmatprep.subr.bf16.mxu0 0
      %1106 = vmatpush1.bf16.msra.mxu0 0
      %1107 = vmatprep.subr.bf16.mxu0 0
      %1108 = vmatpush1.bf16.msra.mxu0 0
      %1109 = vmatprep.subr.bf16.mxu0 0
      %1110 = vmatpush1.bf16.msra.mxu0 0
      %1111 = vmatprep.subr.bf16.mxu0 0
      %1112 = vmatpush1.bf16.msra.mxu0 0
      %1113 = vmatprep.subr.bf16.mxu0 0
      %1114 = vmatpush1.bf16.msra.mxu0 0
      %1115 = vmatprep.mubr.bf16.mxu0 0
      %1116 = vmatmul.mubr.bf16.gmra.mrb[0].mxu0 %v1013
      %v1117 = vpop.f32.mrb[0].mxu0
      %v1118 = vadd.f32 %v1033, %v1117
      %v1119 = vpop.f32.mrb[0].mxu0
      %v1120 = vpop.f32.mrb[0].mxu0
      %v1121 = vadd.f32 %v1033, %v1120
      %v1122 = vpop.f32.mrb[0].mxu0
      %1123 = vmatprep.mubr.bf16.mxu0 0
      %1124 = vmatmul.mubr.bf16.gmra.mrb[0].mxu0 %v1014
      %v1125 = vpop.f32.mrb[0].mxu0
      %v1126 = vadd.f32 %v1033, %v1125
      %v1127 = vpop.f32.mrb[0].mxu0
      %v1128 = vpop.f32.mrb[0].mxu0
      %v1129 = vadd.f32 %v1033, %v1128
      %v1130 = vpop.f32.mrb[0].mxu0
      %1131 = vmatprep.mubr.bf16.mxu0 0
      %1132 = vmatmul.mubr.bf16.gmra.mrb[0].mxu0 %v1015
      %v1133 = vpop.f32.mrb[0].mxu0
      %v1134 = vadd.f32 %v1033, %v1133
      %v1135 = vpop.f32.mrb[0].mxu0
      %v1136 = vpop.f32.mrb[0].mxu0
      %v1137 = vadd.f32 %v1033, %v1136
      %v1138 = vpop.f32.mrb[0].mxu0
      %1139 = vmatprep.mubr.bf16.mxu0 0
      %1140 = vmatmul.mubr.bf16.gmra.mrb[0].mxu0 %v1016
      %v1141 = vpop.f32.mrb[0].mxu0
      %v1142 = vadd.f32 %v1033, %v1141
      %v1143 = vpop.f32.mrb[0].mxu0
      %v1144 = vpop.f32.mrb[0].mxu0
      %v1145 = vadd.f32 %v1033, %v1144
      %v1146 = vpop.f32.mrb[0].mxu0
      %1147 = vmatprep.mubr.bf16.mxu0 0
      %1148 = vmatmul.mubr.bf16.gmra.mrb[0].mxu0 %v1017
      %v1149 = vpop.f32.mrb[0].mxu0
      %v1150 = vadd.f32 %v1033, %v1149
      %v1151 = vpop.f32.mrb[0].mxu0
      %v1152 = vpop.f32.mrb[0].mxu0
      %v1153 = vadd.f32 %v1033, %v1152
      %v1154 = vpop.f32.mrb[0].mxu0
      %1155 = vmatprep.mubr.bf16.mxu0 0
      %1156 = vmatmul.mubr.bf16.gmra.mrb[0].mxu0 %v1018
      %v1157 = vpop.f32.mrb[0].mxu0
      %v1158 = vadd.f32 %v1033, %v1157
      %v1159 = vpop.f32.mrb[0].mxu0
      %v1160 = vpop.f32.mrb[0].mxu0
      %v1161 = vadd.f32 %v1033, %v1160
      %v1162 = vpop.f32.mrb[0].mxu0
      %1163 = vmatprep.mubr.bf16.mxu0 0
      %1164 = vmatmul.mubr.bf16.gmra.mrb[0].mxu0 %v1019
      %v1165 = vpop.f32.mrb[0].mxu0
      %v1166 = vadd.f32 %v1033, %v1165
      %v1167 = vpop.f32.mrb[0].mxu0
      %v1168 = vpop.f32.mrb[0].mxu0
      %v1169 = vadd.f32 %v1033, %v1168
      %v1170 = vpop.f32.mrb[0].mxu0
      %1171 = vmatprep.mubr.bf16.mxu0 0
      %1172 = vmatmul.mubr.bf16.gmra.mrb[0].mxu0 %v1020
      %v1173 = vpop.f32.mrb[0].mxu0
      %v1174 = vadd.f32 %v1033, %v1173
      %v1175 = vpop.f32.mrb[0].mxu0
      %v1176 = vpop.f32.mrb[0].mxu0
      %v1177 = vadd.f32 %v1033, %v1176
      %v1178 = vpop.f32.mrb[0].mxu0
      %1179 = vmatprep.mubr.bf16.mxu0 0
      %1180 = vmatmul.mubr.bf16.gmra.mrb[0].mxu0 %v1021
      %v1181 = vpop.f32.mrb[0].mxu0
      %v1182 = vadd.f32 %v1033, %v1181
      %v1183 = vpop.f32.mrb[0].mxu0
      %v1184 = vpop.f32.mrb[0].mxu0
      %v1185 = vadd.f32 %v1033, %v1184
      %v1186 = vpop.f32.mrb[0].mxu0
      %1187 = vmatprep.mubr.bf16.mxu0 0
      %1188 = vmatmul.mubr.bf16.gmra.mrb[0].mxu0 %v1022
      %v1189 = vpop.f32.mrb[0].mxu0
      %v1190 = vadd.f32 %v1033, %v1189
      %v1191 = vpop.f32.mrb[0].mxu0
      %v1192 = vpop.f32.mrb[0].mxu0
      %v1193 = vadd.f32 %v1033, %v1192
      %v1194 = vpop.f32.mrb[0].mxu0
      %1195 = vmatprep.mubr.bf16.mxu0 0
      %1196 = vmatmul.mubr.bf16.gmra.mrb[0].mxu0 %v1023
      %v1197 = vpop.f32.mrb[0].mxu0
      %v1198 = vadd.f32 %v1033, %v1197
      %v1199 = vpop.f32.mrb[0].mxu0
      %v1200 = vpop.f32.mrb[0].mxu0
      %v1201 = vadd.f32 %v1033, %v1200
      %v1202 = vpop.f32.mrb[0].mxu0
      %1203 = vmatprep.mubr.bf16.mxu0 0
      %1204 = vmatmul.mubr.bf16.gmra.mrb[0].mxu0 %v1024
      %v1205 = vpop.f32.mrb[0].mxu0
      %v1206 = vadd.f32 %v1033, %v1205
      %v1207 = vpop.f32.mrb[0].mxu0
      %v1208 = vpop.f32.mrb[0].mxu0
      %v1209 = vadd.f32 %v1033, %v1208
      %v1210 = vpop.f32.mrb[0].mxu0
      %1211 = vmatprep.mubr.bf16.mxu0 0
      %1212 = vmatmul.mubr.bf16.gmra.mrb[0].mxu0 %v1025
      %v1213 = vpop.f32.mrb[0].mxu0
      %v1214 = vadd.f32 %v1033, %v1213
      %v1215 = vpop.f32.mrb[0].mxu0
      %v1216 = vpop.f32.mrb[0].mxu0
      %v1217 = vadd.f32 %v1033, %v1216
      %v1218 = vpop.f32.mrb[0].mxu0
      %1219 = vmatprep.mubr.bf16.mxu0 0
      %1220 = vmatmul.mubr.bf16.gmra.mrb[0].mxu0 %v1026
      %v1221 = vpop.f32.mrb[0].mxu0
      %v1222 = vadd.f32 %v1033, %v1221
      %v1223 = vpop.f32.mrb[0].mxu0
      %v1224 = vpop.f32.mrb[0].mxu0
      %v1225 = vadd.f32 %v1033, %v1224
      %v1226 = vpop.f32.mrb[0].mxu0
      %1227 = vmatprep.mubr.bf16.mxu0 0
      %1228 = vmatmul.mubr.bf16.gmra.mrb[0].mxu0 %v1027
      %v1229 = vpop.f32.mrb[0].mxu0
      %v1230 = vadd.f32 %v1033, %v1229
      %v1231 = vpop.f32.mrb[0].mxu0
      %v1232 = vpop.f32.mrb[0].mxu0
      %v1233 = vadd.f32 %v1033, %v1232
      %v1234 = vpop.f32.mrb[0].mxu0
      %1235 = vmatprep.mubr.bf16.mxu0 0
      %1236 = vmatmul.mubr.bf16.gmra.mrb[0].mxu0 %v1028
      %v1237 = vpop.f32.mrb[0].mxu0
      %v1238 = vadd.f32 %v1033, %v1237
      %v1239 = vpop.f32.mrb[0].mxu0
      %v1240 = vpop.f32.mrb[0].mxu0
      %v1241 = vadd.f32 %v1033, %v1240
      %v1242 = vpop.f32.mrb[0].mxu0
      %1243 = vdwg.mxu0
      %vm1244 = vcmask 31744
      %1245 = vst.msk [vmem:[%s280] sm:$0xff] %vm1244, %v1118
      %1246 = vst.msk [vmem:[%s280 + $0x8] sm:$0xff] %vm1244, %v1121
      %1247 = vst.msk [vmem:[%s280 + $0x10] sm:$0xff] %vm1244, %v1126
      %1248 = vst.msk [vmem:[%s280 + $0x18] sm:$0xff] %vm1244, %v1129
      %1249 = vst.msk [vmem:[%s280 + $0x20] sm:$0xff] %vm1244, %v1134
      %1250 = vst.msk [vmem:[%s280 + $0x28] sm:$0xff] %vm1244, %v1137
      %1251 = vst.msk [vmem:[%s280 + $0x30] sm:$0xff] %vm1244, %v1142
      %1252 = vst.msk [vmem:[%s280 + $0x38] sm:$0xff] %vm1244, %v1145
      %1253 = vst.msk [vmem:[%s280 + $0x40] sm:$0xff] %vm1244, %v1150
      %1254 = vst.msk [vmem:[%s280 + $0x48] sm:$0xff] %vm1244, %v1153
      %1255 = vst.msk [vmem:[%s280 + $0x50] sm:$0xff] %vm1244, %v1158
      %1256 = vst.msk [vmem:[%s280 + $0x58] sm:$0xff] %vm1244, %v1161
      %1257 = vst.msk [vmem:[%s280 + $0x60] sm:$0xff] %vm1244, %v1166
      %1258 = vst.msk [vmem:[%s280 + $0x68] sm:$0xff] %vm1244, %v1169
      %1259 = vst.msk [vmem:[%s280 + $0x70] sm:$0xff] %vm1244, %v1174
      %1260 = vst.msk [vmem:[%s280 + $0x78] sm:$0xff] %vm1244, %v1177
      %1261 = vst.msk [vmem:[%s280 + $0x80] sm:$0xff] %vm1244, %v1182
      %1262 = vst.msk [vmem:[%s280 + $0x88] sm:$0xff] %vm1244, %v1185
      %1263 = vst.msk [vmem:[%s280 + $0x90] sm:$0xff] %vm1244, %v1190
      %1264 = vst.msk [vmem:[%s280 + $0x98] sm:$0xff] %vm1244, %v1193
      %1265 = vst.msk [vmem:[%s280 + $0xa0] sm:$0xff] %vm1244, %v1198
      %1266 = vst.msk [vmem:[%s280 + $0xa8] sm:$0xff] %vm1244, %v1201
      %1267 = vst.msk [vmem:[%s280 + $0xb0] sm:$0xff] %vm1244, %v1206
      %1268 = vst.msk [vmem:[%s280 + $0xb8] sm:$0xff] %vm1244, %v1209
      %1269 = vst.msk [vmem:[%s280 + $0xc0] sm:$0xff] %vm1244, %v1214
      %1270 = vst.msk [vmem:[%s280 + $0xc8] sm:$0xff] %vm1244, %v1217
      %1271 = vst.msk [vmem:[%s280 + $0xd0] sm:$0xff] %vm1244, %v1222
      %1272 = vst.msk [vmem:[%s280 + $0xd8] sm:$0xff] %vm1244, %v1225
      %1273 = vst.msk [vmem:[%s280 + $0xe0] sm:$0xff] %vm1244, %v1230
      %1274 = vst.msk [vmem:[%s280 + $0xe8] sm:$0xff] %vm1244, %v1233
      %1275 = vst.msk [vmem:[%s280 + $0xf0] sm:$0xff] %vm1244, %v1238
      %1276 = vst.msk [vmem:[%s280 + $0xf8] sm:$0xff] %vm1244, %v1241
      %s1277 = smul.u32 32, %s18
      %p1278 = scmp.lt.s32.totalorder %s1277, 63
      %s1279 = scalar_select %p1278, %s1277, 63
      %s1280 = smul.addr %s1279, 8
      %s1281 = scalar_lea.vmem %s7, %s1280
      // Predicated region
      $region49: #{tpu_custom_call.1} parent=47 // pred_check
        %p1282 = pneg %p188
      $region50: #{tpu_custom_call.1} parent=47 // pred_check_branch
        %1284 = sbr.rel (%p1282) target = $region52
      $region51: #{tpu_custom_call.1} parent=47 // pred_region
        %s1285 = smul.u32 32, %s18
      $region52: #{tpu_custom_call.1} parent=47 // pred_fallthru
        _
    $region48: #{tpu_custom_call.1} parent=5 // pred_fallthru
      _
    %p1286 = scmp.le.s32.totalorder 2, %s13
    // Predicated region
    $region53: #{tpu_custom_call.1} parent=5 // pred_check
      %p1287 = pneg %p1286
    $region54: #{tpu_custom_call.1} parent=5 // pred_check_branch
      %1289 = sbr.rel (%p1287) target = $region56
    $region55: #{tpu_custom_call.1} parent=5 // pred_region
      %s1290 = ssub.s32 %s13, 2
      // Predicated region
      $region57: #{tpu_custom_call.1} parent=55 // pred_check
        %p1291 = pneg %p194
      $region58: #{tpu_custom_call.1} parent=55 // pred_check_branch
        %1293 = sbr.rel (%p1291) target = $region60
      $region59: #{tpu_custom_call.1} parent=55 // pred_region
        %s1294 = smul.u32 32, %s19
        %p1295 = scmp.lt.s32.totalorder %s1294, 63
        %s1296 = scalar_select %p1295, %s1294, 63
        %s1297 = smul.addr %s1296, 8
        %s1298 = scalar_lea.vmem %s7, %s1297
      $region60: #{tpu_custom_call.1} parent=55 // pred_fallthru
        _
    $region56: #{tpu_custom_call.1} parent=5 // pred_fallthru
      _
  $region6: #{tpu_custom_call.1} parent=0 // loop_footer
    %s17 = sadd.s32 1, %s13
  $region7: #{tpu_custom_call.1} parent=0 // loop_footer_branch
    %12 = sbr.rel target = $region3
  $region8: #{tpu_custom_call.1} parent=0 // loop_exit
    _

// kernel: tpu_custom_call.1
$region0: #{tpu_custom_call.1}
  #allocation0 [shape = 'u32[]', space=smem, size = 0x4, offset = 0x4, fixed_abs, tag = 'smem constant byte address 0x4 - core index']
  #allocation1 [shape = 'u32[144,128]{1,0:T(1,128)}', space=vmem, size = 0x12000, scoped, tag = 'internal scratch']
  %s0 = inlined_call_operand.vmem [shape: f32[512,16], index: 0, kind: input, shape index: {}]
  %s1 = inlined_call_operand.vmem [shape: bf16[16,128], index: 1, kind: input, shape index: {}]
  %s2 = inlined_call_operand.vmem [shape: f32[1,128], index: 2, kind: input, shape index: {}]
  %s3 = inlined_call_operand.vmem [shape: bf16[128,128], index: 3, kind: input, shape index: {}]
  %s4 = inlined_call_operand.vmem [shape: f32[1,128], index: 4, kind: input, shape index: {}]
  %s5 = inlined_call_operand.vmem [shape: bf16[128,4], index: 5, kind: input, shape index: {}]
  %s6 = inlined_call_operand.vmem [shape: f32[1,4], index: 6, kind: input, shape index: {}]
  %s7 = inlined_call_operand.vmem [shape: f32[512,4], index: 7, kind: output, shape index: {}]
  %s8 = sld [smem:[#allocation0]]
  $region61: #{tpu_custom_call.1} parent=0
    _
  %s10 = ssub.s32 1, %s8
  %s11 = scalar_select 0, %s10, %s8
  loop: start=0, step=1, limit=4
  $region2: #{tpu_custom_call.1} parent=0 // loop_pre_header
    _
  $region3: #{tpu_custom_call.1} parent=0 // loop_header
    %s13 = sphi 0, %s17
    %p14 = scmp.ge.s32.totalorder %s13, 4
    %s23 = sphi 0, %s25
    %s26 = sphi 0, %s23
    %s27 = sphi 0, %s26
    %s43 = sphi 0, %s27
    %s47 = sphi 0, %s47
    %s49 = sphi 0, %s47
    %s50 = sphi 0, %s49
    %s64 = sphi 0, %s50
    %s68 = sphi 0, %s68
    %s70 = sphi 0, %s68
    %s71 = sphi 0, %s70
    %s85 = sphi 0, %s71
    %s89 = sphi 0, %s89
    %s91 = sphi 0, %s89
    %s92 = sphi 0, %s91
    %s106 = sphi 0, %s92
    %s110 = sphi 0, %s110
    %s112 = sphi 0, %s110
    %s113 = sphi 0, %s112
    %s127 = sphi 0, %s113
    %s131 = sphi 0, %s131
    %s133 = sphi 0, %s131
    %s134 = sphi 0, %s133
    %s148 = sphi 0, %s134
    %s152 = sphi 0, %s152
    %s154 = sphi 0, %s152
    %s155 = sphi 0, %s154
    %s169 = sphi 0, %s155
    %s175 = sphi 0, %s177
    %s178 = sphi 0, %s175
    %s179 = sphi 0, %s178
    %s195 = sphi 0, %s179
  $region4: #{tpu_custom_call.1} parent=0 // loop_header_branch
    %16 = sbr.rel (%p14) target = $region8
  $region5: #{tpu_custom_call.1} parent=0 // loop_body
    %s18 = ssub.s32 %s13, 1
    %s19 = ssub.s32 %s13, 2
    %s20 = sadd.s32 %s13, 1
    %s21 = ssub.s32 %s13, %s20
    %p22 = scmp.eq.s32.totalorder %s21, 0
    %s24 = sadd.s32 %s23, 1
    %s25 = scalar_select %p22, %s23, %s24
    %p28 = pneg %p22
    %p29 = scmp.eq.s32.totalorder %s13, 1
    %p30 = por %p28, %p29
    %p31 = scmp.ne.s32.totalorder %s23, %s26
    %p32 = scmp.eq.s32.totalorder %s13, 0
    %p33 = por %p31, %p32
    %p34 = scmp.ne.s32.totalorder %s23, %s26
    %p35 = scmp.eq.s32.totalorder %s18, 1
    %p36 = por %p34, %p35
    %p37 = scmp.ne.s32.totalorder %s26, %s27
    %p38 = scmp.eq.s32.totalorder %s18, 0
    %p39 = por %p37, %p38
    %p40 = scmp.ne.s32.totalorder %s26, %s27
    %p41 = scmp.eq.s32.totalorder %s19, 1
    %p42 = por %p40, %p41
    %p44 = scmp.ne.s32.totalorder %s27, %s43
    %p45 = scmp.eq.s32.totalorder %s19, 0
    %p46 = por %p44, %p45
    %s48 = sadd.s32 %s47, 1
    %p51 = scmp.eq.s32.totalorder %s13, 1
    %p52 = scmp.ne.s32.totalorder %s47, %s49
    %p53 = scmp.eq.s32.totalorder %s13, 0
    %p54 = por %p52, %p53
    %p55 = scmp.ne.s32.totalorder %s47, %s49
    %p56 = scmp.eq.s32.totalorder %s18, 1
    %p57 = por %p55, %p56
    %p58 = scmp.ne.s32.totalorder %s49, %s50
    %p59 = scmp.eq.s32.totalorder %s18, 0
    %p60 = por %p58, %p59
    %p61 = scmp.ne.s32.totalorder %s49, %s50
    %p62 = scmp.eq.s32.totalorder %s19, 1
    %p63 = por %p61, %p62
    %p65 = scmp.ne.s32.totalorder %s50, %s64
    %p66 = scmp.eq.s32.totalorder %s19, 0
    %p67 = por %p65, %p66
    %s69 = sadd.s32 %s68, 1
    %p72 = scmp.eq.s32.totalorder %s13, 1
    %p73 = scmp.ne.s32.totalorder %s68, %s70
    %p74 = scmp.eq.s32.totalorder %s13, 0
    %p75 = por %p73, %p74
    %p76 = scmp.ne.s32.totalorder %s68, %s70
    %p77 = scmp.eq.s32.totalorder %s18, 1
    %p78 = por %p76, %p77
    %p79 = scmp.ne.s32.totalorder %s70, %s71
    %p80 = scmp.eq.s32.totalorder %s18, 0
    %p81 = por %p79, %p80
    %p82 = scmp.ne.s32.totalorder %s70, %s71
    %p83 = scmp.eq.s32.totalorder %s19, 1
    %p84 = por %p82, %p83
    %p86 = scmp.ne.s32.totalorder %s71, %s85
    %p87 = scmp.eq.s32.totalorder %s19, 0
    %p88 = por %p86, %p87
    %s90 = sadd.s32 %s89, 1
    %p93 = scmp.eq.s32.totalorder %s13, 1
    %p94 = scmp.ne.s32.totalorder %s89, %s91
    %p95 = scmp.eq.s32.totalorder %s13, 0
    %p96 = por %p94, %p95
    %p97 = scmp.ne.s32.totalorder %s89, %s91
    %p98 = scmp.eq.s32.totalorder %s18, 1
    %p99 = por %p97, %p98
    %p100 = scmp.ne.s32.totalorder %s91, %s92
    %p101 = scmp.eq.s32.totalorder %s18, 0
    %p102 = por %p100, %p101
    %p103 = scmp.ne.s32.totalorder %s91, %s92
    %p104 = scmp.eq.s32.totalorder %s19, 1
    %p105 = por %p103, %p104
    %p107 = scmp.ne.s32.totalorder %s92, %s106
    %p108 = scmp.eq.s32.totalorder %s19, 0
    %p109 = por %p107, %p108
    %s111 = sadd.s32 %s110, 1
    %p114 = scmp.eq.s32.totalorder %s13, 1
    %p115 = scmp.ne.s32.totalorder %s110, %s112
    %p116 = scmp.eq.s32.totalorder %s13, 0
    %p117 = por %p115, %p116
    %p118 = scmp.ne.s32.totalorder %s110, %s112
    %p119 = scmp.eq.s32.totalorder %s18, 1
    %p120 = por %p118, %p119
    %p121 = scmp.ne.s32.totalorder %s112, %s113
    %p122 = scmp.eq.s32.totalorder %s18, 0
    %p123 = por %p121, %p122
    %p124 = scmp.ne.s32.totalorder %s112, %s113
    %p125 = scmp.eq.s32.totalorder %s19, 1
    %p126 = por %p124, %p125
    %p128 = scmp.ne.s32.totalorder %s113, %s127
    %p129 = scmp.eq.s32.totalorder %s19, 0
    %p130 = por %p128, %p129
    %s132 = sadd.s32 %s131, 1
    %p135 = scmp.eq.s32.totalorder %s13, 1
    %p136 = scmp.ne.s32.totalorder %s131, %s133
    %p137 = scmp.eq.s32.totalorder %s13, 0
    %p138 = por %p136, %p137
    %p139 = scmp.ne.s32.totalorder %s131, %s133
    %p140 = scmp.eq.s32.totalorder %s18, 1
    %p141 = por %p139, %p140
    %p142 = scmp.ne.s32.totalorder %s133, %s134
    %p143 = scmp.eq.s32.totalorder %s18, 0
    %p144 = por %p142, %p143
    %p145 = scmp.ne.s32.totalorder %s133, %s134
    %p146 = scmp.eq.s32.totalorder %s19, 1
    %p147 = por %p145, %p146
    %p149 = scmp.ne.s32.totalorder %s134, %s148
    %p150 = scmp.eq.s32.totalorder %s19, 0
    %p151 = por %p149, %p150
    %s153 = sadd.s32 %s152, 1
    %p156 = scmp.eq.s32.totalorder %s13, 1
    %p157 = scmp.ne.s32.totalorder %s152, %s154
    %p158 = scmp.eq.s32.totalorder %s13, 0
    %p159 = por %p157, %p158
    %p160 = scmp.ne.s32.totalorder %s152, %s154
    %p161 = scmp.eq.s32.totalorder %s18, 1
    %p162 = por %p160, %p161
    %p163 = scmp.ne.s32.totalorder %s154, %s155
    %p164 = scmp.eq.s32.totalorder %s18, 0
    %p165 = por %p163, %p164
    %p166 = scmp.ne.s32.totalorder %s154, %s155
    %p167 = scmp.eq.s32.totalorder %s19, 1
    %p168 = por %p166, %p167
    %p170 = scmp.ne.s32.totalorder %s155, %s169
    %p171 = scmp.eq.s32.totalorder %s19, 0
    %p172 = por %p170, %p171
    %s173 = ssub.s32 %s13, %s20
    %p174 = scmp.eq.s32.totalorder %s173, 0
    %s176 = sadd.s32 %s175, 1
    %s177 = scalar_select %p174, %s175, %s176
    %p180 = pneg %p174
    %p181 = scmp.eq.s32.totalorder %s13, 1
    %p182 = por %p180, %p181
    %p183 = scmp.ne.s32.totalorder %s175, %s178
    %p184 = scmp.eq.s32.totalorder %s13, 0
    %p185 = por %p183, %p184
    %p186 = scmp.ne.s32.totalorder %s175, %s178
    %p187 = scmp.eq.s32.totalorder %s18, 1
    %p188 = por %p186, %p187
    %p189 = scmp.ne.s32.totalorder %s178, %s179
    %p190 = scmp.eq.s32.totalorder %s18, 0
    %p191 = por %p189, %p190
    %p192 = scmp.ne.s32.totalorder %s178, %s179
    %p193 = scmp.eq.s32.totalorder %s19, 1
    %p194 = por %p192, %p193
    %p196 = scmp.ne.s32.totalorder %s179, %s195
    %p197 = scmp.eq.s32.totalorder %s19, 0
    %p198 = por %p196, %p197
    %p199 = scmp.le.s32.totalorder 1, %s13
    %p200 = scmp.lt.s32.totalorder %s13, 3
    %p201 = pnand %p199, %p200
    %p202 = pneg %p201
    // Predicated region
    $region9: #{tpu_custom_call.1} parent=5 // pred_check
      _
    $region10: #{tpu_custom_call.1} parent=5 // pred_check_branch
      %204 = sbr.rel (%p201) target = $region12
    $region11: #{tpu_custom_call.1} parent=5 // pred_region
      %s205 = ssub.s32 %s13, 1
      // Predicated region
      $region13: #{tpu_custom_call.1} parent=11 // pred_check
        %p206 = pneg %p60
      $region14: #{tpu_custom_call.1} parent=11 // pred_check_branch
        %208 = sbr.rel (%p206) target = $region16
      $region15: #{tpu_custom_call.1} parent=11 // pred_region
        _
      $region16: #{tpu_custom_call.1} parent=11 // pred_fallthru
        _
      // Predicated region
      $region17: #{tpu_custom_call.1} parent=11 // pred_check
        %p209 = pneg %p81
      $region18: #{tpu_custom_call.1} parent=11 // pred_check_branch
        %211 = sbr.rel (%p209) target = $region20
      $region19: #{tpu_custom_call.1} parent=11 // pred_region
        _
      $region20: #{tpu_custom_call.1} parent=11 // pred_fallthru
        _
      // Predicated region
      $region21: #{tpu_custom_call.1} parent=11 // pred_check
        %p212 = pneg %p102
      $region22: #{tpu_custom_call.1} parent=11 // pred_check_branch
        %214 = sbr.rel (%p212) target = $region24
      $region23: #{tpu_custom_call.1} parent=11 // pred_region
        _
      $region24: #{tpu_custom_call.1} parent=11 // pred_fallthru
        _
      // Predicated region
      $region25: #{tpu_custom_call.1} parent=11 // pred_check
        %p215 = pneg %p123
      $region26: #{tpu_custom_call.1} parent=11 // pred_check_branch
        %217 = sbr.rel (%p215) target = $region28
      $region27: #{tpu_custom_call.1} parent=11 // pred_region
        _
      $region28: #{tpu_custom_call.1} parent=11 // pred_fallthru
        _
      // Predicated region
      $region29: #{tpu_custom_call.1} parent=11 // pred_check
        %p218 = pneg %p144
      $region30: #{tpu_custom_call.1} parent=11 // pred_check_branch
        %220 = sbr.rel (%p218) target = $region32
      $region31: #{tpu_custom_call.1} parent=11 // pred_region
        _
      $region32: #{tpu_custom_call.1} parent=11 // pred_fallthru
        _
      // Predicated region
      $region33: #{tpu_custom_call.1} parent=11 // pred_check
        %p221 = pneg %p165
      $region34: #{tpu_custom_call.1} parent=11 // pred_check_branch
        %223 = sbr.rel (%p221) target = $region36
      $region35: #{tpu_custom_call.1} parent=11 // pred_region
        _
      $region36: #{tpu_custom_call.1} parent=11 // pred_fallthru
        _
    $region12: #{tpu_custom_call.1} parent=5 // pred_fallthru
      _
    %p224 = scmp.lt.s32.totalorder %s13, 2
    // Predicated region
    $region37: #{tpu_custom_call.1} parent=5 // pred_check
      %p225 = pneg %p224
    $region38: #{tpu_custom_call.1} parent=5 // pred_check_branch
      %227 = sbr.rel (%p225) target = $region40
    $region39: #{tpu_custom_call.1} parent=5 // pred_region
      // Predicated region
      $region41: #{tpu_custom_call.1} parent=39 // pred_check
        %p228 = pneg %p33
      $region42: #{tpu_custom_call.1} parent=39 // pred_check_branch
        %230 = sbr.rel (%p228) target = $region44
      $region43: #{tpu_custom_call.1} parent=39 // pred_region
        %s231 = smul.u32 32, %s13
        %p232 = scmp.lt.s32.totalorder %s231, 63
        %s233 = scalar_select %p232, %s231, 63
        %s234 = smul.addr %s233, 8
        %s235 = scalar_lea.vmem %s0, %s234
        %s236 = smul.u32 32, %s13
      $region44: #{tpu_custom_call.1} parent=39 // pred_fallthru
        _
    $region40: #{tpu_custom_call.1} parent=5 // pred_fallthru
      _
    %p237 = scmp.le.s32.totalorder 1, %s13
    %p238 = scmp.lt.s32.totalorder %s13, 3
    %p239 = pnand %p237, %p238
    %p240 = pneg %p239
    // Predicated region
    $region45: #{tpu_custom_call.1} parent=5 // pred_check
      _
    $region46: #{tpu_custom_call.1} parent=5 // pred_check_branch
      %242 = sbr.rel (%p239) target = $region48
    $region47: #{tpu_custom_call.1} parent=5 // pred_region
      %s243 = ssub.s32 %s13, 1
      %s244 = smul.u32 32, %s18
      %p245 = scmp.lt.s32.totalorder %s244, 63
      %s246 = scalar_select %p245, %s244, 63
      %s247 = smul.addr %s246, 8
      %s248 = scalar_lea.vmem %s0, %s247
      %p249 = pneg %p39
      %p250 = pneg %p36
      %p251 = pneg %p60
      %p252 = pneg %p57
      %p253 = pneg %p81
      %p254 = pneg %p78
      %p255 = pneg %p102
      %p256 = pneg %p99
      %p257 = pneg %p123
      %p258 = pneg %p120
      %p259 = pneg %p144
      %p260 = pneg %p141
      %p261 = pneg %p165
      %p262 = pneg %p162
      %p263 = pneg %p191
      %p264 = pneg %p188
      %s265 = smul.u32 32, %s18
      %p266 = scmp.lt.s32.totalorder %s265, 63
      %s267 = scalar_select %p266, %s265, 63
      %s268 = smul.addr %s267, 8
      %s269 = scalar_lea.vmem %s7, %s268
      %s270 = smul.u32 32, %s18
      %p271 = scmp.lt.s32.totalorder %s270, 63
      %s272 = scalar_select %p271, %s270, 63
      %s273 = smul.addr %s272, 8
      %s274 = scalar_lea.vmem %s0, %s273
      %s275 = smul.u32 32, %s18
      %s276 = smul.u32 32, %s18
      %p277 = scmp.lt.s32.totalorder %s276, 63
      %s278 = scalar_select %p277, %s276, 63
      %s279 = smul.addr %s278, 8
      %s280 = scalar_lea.vmem %s7, %s279
      %s281 = smul.u32 32, %s18
      %v283 = vld [vmem:[%s274] sm:$0xff]
      %v284 = vld [vmem:[%s274 + $0x8] sm:$0xff]
      %v285 = vld [vmem:[%s274 + $0x10] sm:$0xff]
      %v286 = vld [vmem:[%s274 + $0x18] sm:$0xff]
      %v287 = vld [vmem:[%s274 + $0x20] sm:$0xff]
      %v288 = vld [vmem:[%s274 + $0x28] sm:$0xff]
      %v289 = vld [vmem:[%s274 + $0x30] sm:$0xff]
      %v290 = vld [vmem:[%s274 + $0x38] sm:$0xff]
      %v291 = vld [vmem:[%s274 + $0x40] sm:$0xff]
      %v292 = vld [vmem:[%s274 + $0x48] sm:$0xff]
      %v293 = vld [vmem:[%s274 + $0x50] sm:$0xff]
      %v294 = vld [vmem:[%s274 + $0x58] sm:$0xff]
      %v295 = vld [vmem:[%s274 + $0x60] sm:$0xff]
      %v296 = vld [vmem:[%s274 + $0x68] sm:$0xff]
      %v297 = vld [vmem:[%s274 + $0x70] sm:$0xff]
      %v298 = vld [vmem:[%s274 + $0x78] sm:$0xff]
      %v299 = vld [vmem:[%s274 + $0x80] sm:$0xff]
      %v300 = vld [vmem:[%s274 + $0x88] sm:$0xff]
      %v301 = vld [vmem:[%s274 + $0x90] sm:$0xff]
      %v302 = vld [vmem:[%s274 + $0x98] sm:$0xff]
      %v303 = vld [vmem:[%s274 + $0xa0] sm:$0xff]
      %v304 = vld [vmem:[%s274 + $0xa8] sm:$0xff]
      %v305 = vld [vmem:[%s274 + $0xb0] sm:$0xff]
      %v306 = vld [vmem:[%s274 + $0xb8] sm:$0xff]
      %v307 = vld [vmem:[%s274 + $0xc0] sm:$0xff]
      %v308 = vld [vmem:[%s274 + $0xc8] sm:$0xff]
      %v309 = vld [vmem:[%s274 + $0xd0] sm:$0xff]
      %v310 = vld [vmem:[%s274 + $0xd8] sm:$0xff]
      %v311 = vld [vmem:[%s274 + $0xe0] sm:$0xff]
      %v312 = vld [vmem:[%s274 + $0xe8] sm:$0xff]
      %v313 = vld [vmem:[%s274 + $0xf0] sm:$0xff]
      %v314 = vld [vmem:[%s274 + $0xf8] sm:$0xff]
      %v315 = vld [vmem:[%s1] sm:$0xf]
      %v316 = vld [vmem:[%s1 + $0x4] sm:$0xf]
      %v317 = vld [vmem:[%s2] sm:$0x1]
      %v318 = vpack.c.bf16 %v284, %v283
      %v319 = vpack.c.bf16 %v286, %v285
      %v320 = vpack.c.bf16 %v288, %v287
      %v321 = vpack.c.bf16 %v290, %v289
      %v322 = vpack.c.bf16 %v292, %v291
      %v323 = vpack.c.bf16 %v294, %v293
      %v324 = vpack.c.bf16 %v296, %v295
      %v325 = vpack.c.bf16 %v298, %v297
      %v326 = vpack.c.bf16 %v300, %v299
      %v327 = vpack.c.bf16 %v302, %v301
      %v328 = vpack.c.bf16 %v304, %v303
      %v329 = vpack.c.bf16 %v306, %v305
      %v330 = vpack.c.bf16 %v308, %v307
      %v331 = vpack.c.bf16 %v310, %v309
      %v332 = vpack.c.bf16 %v312, %v311
      %v333 = vpack.c.bf16 %v314, %v313
      %v335 = vlaneseq
      %v336 = vshrl.u32 %v335, 7
      %v337 = vsub.s32 0, %v336
      %v338 = vrot.slane %v317, %v337
      %v342 = vunpack.c.l.b16 %v315
      %v343 = vunpack.c.l.b16 %v316
      %v344 = vpack.c.b16 %v343, %v342
      %vm346 = vcmask 130048
      %v348 = vsel %vm346, %v318, 0
      %v351 = vsel %vm346, %v319, 0
      %v354 = vsel %vm346, %v320, 0
      %v357 = vsel %vm346, %v321, 0
      %v360 = vsel %vm346, %v322, 0
      %v363 = vsel %vm346, %v323, 0
      %v366 = vsel %vm346, %v324, 0
      %v369 = vsel %vm346, %v325, 0
      %v372 = vsel %vm346, %v326, 0
      %v375 = vsel %vm346, %v327, 0
      %v378 = vsel %vm346, %v328, 0
      %v381 = vsel %vm346, %v329, 0
      %v384 = vsel %vm346, %v330, 0
      %v387 = vsel %vm346, %v331, 0
      %v390 = vsel %vm346, %v332, 0
      %v393 = vsel %vm346, %v333, 0
      %395 = vmatprep.subr.bf16.mxu0 0
      %396 = vmatpush1.bf16.msra.mxu0 %v344
      %397 = vmatprep.subr.bf16.mxu0 0
      %398 = vmatpush1.bf16.msra.mxu0 0
      %399 = vmatprep.subr.bf16.mxu0 0
      %400 = vmatpush1.bf16.msra.mxu0 0
      %401 = vmatprep.subr.bf16.mxu0 0
      %402 = vmatpush1.bf16.msra.mxu0 0
      %403 = vmatprep.subr.bf16.mxu0 0
      %404 = vmatpush1.bf16.msra.mxu0 0
      %405 = vmatprep.subr.bf16.mxu0 0
      %406 = vmatpush1.bf16.msra.mxu0 0
      %407 = vmatprep.subr.bf16.mxu0 0
      %408 = vmatpush1.bf16.msra.mxu0 0
      %409 = vmatprep.subr.bf16.mxu0 0
      %410 = vmatpush1.bf16.msra.mxu0 0
      %411 = vmatprep.subr.bf16.mxu0 0
      %412 = vmatpush1.bf16.msra.mxu0 0
      %413 = vmatprep.subr.bf16.mxu0 0
      %414 = vmatpush1.bf16.msra.mxu0 0
      %415 = vmatprep.subr.bf16.mxu0 0
      %416 = vmatpush1.bf16.msra.mxu0 0
      %417 = vmatprep.subr.bf16.mxu0 0
      %418 = vmatpush1.bf16.msra.mxu0 0
      %419 = vmatprep.subr.bf16.mxu0 0
      %420 = vmatpush1.bf16.msra.mxu0 0
      %421 = vmatprep.subr.bf16.mxu0 0
      %422 = vmatpush1.bf16.msra.mxu0 0
      %423 = vmatprep.subr.bf16.mxu0 0
      %424 = vmatpush1.bf16.msra.mxu0 0
      %425 = vmatprep.subr.bf16.mxu0 0
      %426 = vmatpush1.bf16.msra.mxu0 0
      %427 = vmatprep.mubr.bf16.mxu0 0
      %428 = vmatmul.mubr.bf16.gmra.mrb[0].mxu0 %v348
      %v429 = vpop.f32.mrb[0].mxu0
      %v430 = vadd.f32 %v338, %v429
      %v431 = vpop.f32.mrb[0].mxu0
      %v432 = vpop.f32.mrb[0].mxu0
      %v433 = vadd.f32 %v338, %v432
      %v434 = vpop.f32.mrb[0].mxu0
      %435 = vmatprep.mubr.bf16.mxu0 0
      %436 = vmatmul.mubr.bf16.gmra.mrb[0].mxu0 %v351
      %v437 = vpop.f32.mrb[0].mxu0
      %v438 = vadd.f32 %v338, %v437
      %v439 = vpop.f32.mrb[0].mxu0
      %v440 = vpop.f32.mrb[0].mxu0
      %v441 = vadd.f32 %v338, %v440
      %v442 = vpop.f32.mrb[0].mxu0
      %443 = vmatprep.mubr.bf16.mxu0 0
      %444 = vmatmul.mubr.bf16.gmra.mrb[0].mxu0 %v354
      %v445 = vpop.f32.mrb[0].mxu0
      %v446 = vadd.f32 %v338, %v445
      %v447 = vpop.f32.mrb[0].mxu0
      %v448 = vpop.f32.mrb[0].mxu0
      %v449 = vadd.f32 %v338, %v448
      %v450 = vpop.f32.mrb[0].mxu0
      %451 = vmatprep.mubr.bf16.mxu0 0
      %452 = vmatmul.mubr.bf16.gmra.mrb[0].mxu0 %v357
      %v453 = vpop.f32.mrb[0].mxu0
      %v454 = vadd.f32 %v338, %v453
      %v455 = vpop.f32.mrb[0].mxu0
      %v456 = vpop.f32.mrb[0].mxu0
      %v457 = vadd.f32 %v338, %v456
      %v458 = vpop.f32.mrb[0].mxu0
      %459 = vmatprep.mubr.bf16.mxu0 0
      %460 = vmatmul.mubr.bf16.gmra.mrb[0].mxu0 %v360
      %v461 = vpop.f32.mrb[0].mxu0
      %v462 = vadd.f32 %v338, %v461
      %v463 = vpop.f32.mrb[0].mxu0
      %v464 = vpop.f32.mrb[0].mxu0
      %v465 = vadd.f32 %v338, %v464
      %v466 = vpop.f32.mrb[0].mxu0
      %467 = vmatprep.mubr.bf16.mxu0 0
      %468 = vmatmul.mubr.bf16.gmra.mrb[0].mxu0 %v363
      %v469 = vpop.f32.mrb[0].mxu0
      %v470 = vadd.f32 %v338, %v469
      %v471 = vpop.f32.mrb[0].mxu0
      %v472 = vpop.f32.mrb[0].mxu0
      %v473 = vadd.f32 %v338, %v472
      %v474 = vpop.f32.mrb[0].mxu0
      %475 = vmatprep.mubr.bf16.mxu0 0
      %476 = vmatmul.mubr.bf16.gmra.mrb[0].mxu0 %v366
      %v477 = vpop.f32.mrb[0].mxu0
      %v478 = vadd.f32 %v338, %v477
      %v479 = vpop.f32.mrb[0].mxu0
      %v480 = vpop.f32.mrb[0].mxu0
      %v481 = vadd.f32 %v338, %v480
      %v482 = vpop.f32.mrb[0].mxu0
      %483 = vmatprep.mubr.bf16.mxu0 0
      %484 = vmatmul.mubr.bf16.gmra.mrb[0].mxu0 %v369
      %v485 = vpop.f32.mrb[0].mxu0
      %v486 = vadd.f32 %v338, %v485
      %v487 = vpop.f32.mrb[0].mxu0
      %v488 = vpop.f32.mrb[0].mxu0
      %v489 = vadd.f32 %v338, %v488
      %v490 = vpop.f32.mrb[0].mxu0
      %491 = vmatprep.mubr.bf16.mxu0 0
      %492 = vmatmul.mubr.bf16.gmra.mrb[0].mxu0 %v372
      %v493 = vpop.f32.mrb[0].mxu0
      %v494 = vadd.f32 %v338, %v493
      %v495 = vpop.f32.mrb[0].mxu0
      %v496 = vpop.f32.mrb[0].mxu0
      %v497 = vadd.f32 %v338, %v496
      %v498 = vpop.f32.mrb[0].mxu0
      %499 = vmatprep.mubr.bf16.mxu0 0
      %500 = vmatmul.mubr.bf16.gmra.mrb[0].mxu0 %v375
      %v501 = vpop.f32.mrb[0].mxu0
      %v502 = vadd.f32 %v338, %v501
      %v503 = vpop.f32.mrb[0].mxu0
      %v504 = vpop.f32.mrb[0].mxu0
      %v505 = vadd.f32 %v338, %v504
      %v506 = vpop.f32.mrb[0].mxu0
      %507 = vmatprep.mubr.bf16.mxu0 0
      %508 = vmatmul.mubr.bf16.gmra.mrb[0].mxu0 %v378
      %v509 = vpop.f32.mrb[0].mxu0
      %v510 = vadd.f32 %v338, %v509
      %v511 = vpop.f32.mrb[0].mxu0
      %v512 = vpop.f32.mrb[0].mxu0
      %v513 = vadd.f32 %v338, %v512
      %v514 = vpop.f32.mrb[0].mxu0
      %515 = vmatprep.mubr.bf16.mxu0 0
      %516 = vmatmul.mubr.bf16.gmra.mrb[0].mxu0 %v381
      %v517 = vpop.f32.mrb[0].mxu0
      %v518 = vadd.f32 %v338, %v517
      %v519 = vpop.f32.mrb[0].mxu0
      %v520 = vpop.f32.mrb[0].mxu0
      %v521 = vadd.f32 %v338, %v520
      %v522 = vpop.f32.mrb[0].mxu0
      %523 = vmatprep.mubr.bf16.mxu0 0
      %524 = vmatmul.mubr.bf16.gmra.mrb[0].mxu0 %v384
      %v525 = vpop.f32.mrb[0].mxu0
      %v526 = vadd.f32 %v338, %v525
      %v527 = vpop.f32.mrb[0].mxu0
      %v528 = vpop.f32.mrb[0].mxu0
      %v529 = vadd.f32 %v338, %v528
      %v530 = vpop.f32.mrb[0].mxu0
      %531 = vmatprep.mubr.bf16.mxu0 0
      %532 = vmatmul.mubr.bf16.gmra.mrb[0].mxu0 %v387
      %v533 = vpop.f32.mrb[0].mxu0
      %v534 = vadd.f32 %v338, %v533
      %v535 = vpop.f32.mrb[0].mxu0
      %v536 = vpop.f32.mrb[0].mxu0
      %v537 = vadd.f32 %v338, %v536
      %v538 = vpop.f32.mrb[0].mxu0
      %539 = vmatprep.mubr.bf16.mxu0 0
      %540 = vmatmul.mubr.bf16.gmra.mrb[0].mxu0 %v390
      %v541 = vpop.f32.mrb[0].mxu0
      %v542 = vadd.f32 %v338, %v541
      %v543 = vpop.f32.mrb[0].mxu0
      %v544 = vpop.f32.mrb[0].mxu0
      %v545 = vadd.f32 %v338, %v544
      %v546 = vpop.f32.mrb[0].mxu0
      %547 = vmatprep.mubr.bf16.mxu0 0
      %548 = vmatmul.mubr.bf16.gmra.mrb[0].mxu0 %v393
      %v549 = vpop.f32.mrb[0].mxu0
      %v550 = vadd.f32 %v338, %v549
      %v551 = vpop.f32.mrb[0].mxu0
      %v552 = vpop.f32.mrb[0].mxu0
      %v553 = vadd.f32 %v338, %v552
      %v554 = vpop.f32.mrb[0].mxu0
      %555 = vdwg.mxu0
      %vm556 = vcmp.ge.f32.partialorder %v430, 0.0
      %vm557 = vcmp.ge.f32.partialorder %v433, 0.0
      %vm558 = vcmp.ge.f32.partialorder %v438, 0.0
      %vm559 = vcmp.ge.f32.partialorder %v441, 0.0
      %vm560 = vcmp.ge.f32.partialorder %v446, 0.0
      %vm561 = vcmp.ge.f32.partialorder %v449, 0.0
      %vm562 = vcmp.ge.f32.partialorder %v454, 0.0
      %vm563 = vcmp.ge.f32.partialorder %v457, 0.0
      %vm564 = vcmp.ge.f32.partialorder %v462, 0.0
      %vm565 = vcmp.ge.f32.partialorder %v465, 0.0
      %vm566 = vcmp.ge.f32.partialorder %v470, 0.0
      %vm567 = vcmp.ge.f32.partialorder %v473, 0.0
      %vm568 = vcmp.ge.f32.partialorder %v478, 0.0
      %vm569 = vcmp.ge.f32.partialorder %v481, 0.0
      %vm570 = vcmp.ge.f32.partialorder %v486, 0.0
      %vm571 = vcmp.ge.f32.partialorder %v489, 0.0
      %vm572 = vcmp.ge.f32.partialorder %v494, 0.0
      %vm573 = vcmp.ge.f32.partialorder %v497, 0.0
      %vm574 = vcmp.ge.f32.partialorder %v502, 0.0
      %vm575 = vcmp.ge.f32.partialorder %v505, 0.0
      %vm576 = vcmp.ge.f32.partialorder %v510, 0.0
      %vm577 = vcmp.ge.f32.partialorder %v513, 0.0
      %vm578 = vcmp.ge.f32.partialorder %v518, 0.0
      %vm579 = vcmp.ge.f32.partialorder %v521, 0.0
      %vm580 = vcmp.ge.f32.partialorder %v526, 0.0
      %vm581 = vcmp.ge.f32.partialorder %v529, 0.0
      %vm582 = vcmp.ge.f32.partialorder %v534, 0.0
      %vm583 = vcmp.ge.f32.partialorder %v537, 0.0
      %vm584 = vcmp.ge.f32.partialorder %v542, 0.0
      %vm585 = vcmp.ge.f32.partialorder %v545, 0.0
      %vm586 = vcmp.ge.f32.partialorder %v550, 0.0
      %vm587 = vcmp.ge.f32.partialorder %v553, 0.0
      %v588 = vmul.f32 %v430, 0.01
      %v589 = vmul.f32 %v433, 0.01
      %v590 = vmul.f32 %v438, 0.01
      %v591 = vmul.f32 %v441, 0.01
      %v592 = vmul.f32 %v446, 0.01
      %v593 = vmul.f32 %v449, 0.01
      %v594 = vmul.f32 %v454, 0.01
      %v595 = vmul.f32 %v457, 0.01
      %v596 = vmul.f32 %v462, 0.01
      %v597 = vmul.f32 %v465, 0.01
      %v598 = vmul.f32 %v470, 0.01
      %v599 = vmul.f32 %v473, 0.01
      %v600 = vmul.f32 %v478, 0.01
      %v601 = vmul.f32 %v481, 0.01
      %v602 = vmul.f32 %v486, 0.01
      %v603 = vmul.f32 %v489, 0.01
      %v604 = vmul.f32 %v494, 0.01
      %v605 = vmul.f32 %v497, 0.01
      %v606 = vmul.f32 %v502, 0.01
      %v607 = vmul.f32 %v505, 0.01
      %v608 = vmul.f32 %v510, 0.01
      %v609 = vmul.f32 %v513, 0.01
      %v610 = vmul.f32 %v518, 0.01
      %v611 = vmul.f32 %v521, 0.01
      %v612 = vmul.f32 %v526, 0.01
      %v613 = vmul.f32 %v529, 0.01
      %v614 = vmul.f32 %v534, 0.01
      %v615 = vmul.f32 %v537, 0.01
      %v616 = vmul.f32 %v542, 0.01
      %v617 = vmul.f32 %v545, 0.01
      %v618 = vmul.f32 %v550, 0.01
      %v619 = vmul.f32 %v553, 0.01
      %v620 = vsel %vm556, %v430, %v588
      %v621 = vsel %vm557, %v433, %v589
      %v622 = vsel %vm558, %v438, %v590
      %v623 = vsel %vm559, %v441, %v591
      %v624 = vsel %vm560, %v446, %v592
      %v625 = vsel %vm561, %v449, %v593
      %v626 = vsel %vm562, %v454, %v594
      %v627 = vsel %vm563, %v457, %v595
      %v628 = vsel %vm564, %v462, %v596
      %v629 = vsel %vm565, %v465, %v597
      %v630 = vsel %vm566, %v470, %v598
      %v631 = vsel %vm567, %v473, %v599
      %v632 = vsel %vm568, %v478, %v600
      %v633 = vsel %vm569, %v481, %v601
      %v634 = vsel %vm570, %v486, %v602
      %v635 = vsel %vm571, %v489, %v603
      %v636 = vsel %vm572, %v494, %v604
      %v637 = vsel %vm573, %v497, %v605
      %v638 = vsel %vm574, %v502, %v606
      %v639 = vsel %vm575, %v505, %v607
      %v640 = vsel %vm576, %v510, %v608
      %v641 = vsel %vm577, %v513, %v609
      %v642 = vsel %vm578, %v518, %v610
      %v643 = vsel %vm579, %v521, %v611
      %v644 = vsel %vm580, %v526, %v612
      %v645 = vsel %vm581, %v529, %v613
      %v646 = vsel %vm582, %v534, %v614
      %v647 = vsel %vm583, %v537, %v615
      %v648 = vsel %vm584, %v542, %v616
      %v649 = vsel %vm585, %v545, %v617
      %v650 = vsel %vm586, %v550, %v618
      %v651 = vsel %vm587, %v553, %v619
      %v652 = vld [vmem:[%s3] sm:$0xf]
      %v653 = vld [vmem:[%s3 + $0x4] sm:$0xf]
      %v654 = vld [vmem:[%s3 + $0x8] sm:$0xf]
      %v655 = vld [vmem:[%s3 + $0xc] sm:$0xf]
      %v656 = vld [vmem:[%s3 + $0x10] sm:$0xf]
      %v657 = vld [vmem:[%s3 + $0x14] sm:$0xf]
      %v658 = vld [vmem:[%s3 + $0x18] sm:$0xf]
      %v659 = vld [vmem:[%s3 + $0x1c] sm:$0xf]
      %v660 = vld [vmem:[%s3 + $0x20] sm:$0xf]
      %v661 = vld [vmem:[%s3 + $0x24] sm:$0xf]
      %v662 = vld [vmem:[%s3 + $0x28] sm:$0xf]
      %v663 = vld [vmem:[%s3 + $0x2c] sm:$0xf]
      %v664 = vld [vmem:[%s3 + $0x30] sm:$0xf]
      %v665 = vld [vmem:[%s3 + $0x34] sm:$0xf]
      %v666 = vld [vmem:[%s3 + $0x38] sm:$0xf]
      %v667 = vld [vmem:[%s3 + $0x3c] sm:$0xf]
      %v668 = vld [vmem:[%s4] sm:$0x1]
      %v669 = vpack.c.bf16 %v621, %v620
      %v670 = vpack.c.bf16 %v623, %v622
      %v671 = vpack.c.bf16 %v625, %v624
      %v672 = vpack.c.bf16 %v627, %v626
      %v673 = vpack.c.bf16 %v629, %v628
      %v674 = vpack.c.bf16 %v631, %v630
      %v675 = vpack.c.bf16 %v633, %v632
      %v676 = vpack.c.bf16 %v635, %v634
      %v677 = vpack.c.bf16 %v637, %v636
      %v678 = vpack.c.bf16 %v639, %v638
      %v679 = vpack.c.bf16 %v641, %v640
      %v680 = vpack.c.bf16 %v643, %v642
      %v681 = vpack.c.bf16 %v645, %v644
      %v682 = vpack.c.bf16 %v647, %v646
      %v683 = vpack.c.bf16 %v649, %v648
      %v684 = vpack.c.bf16 %v651, %v650
      %v686 = vlaneseq
      %v687 = vshrl.u32 %v686, 7
      %v688 = vsub.s32 0, %v687
      %v689 = vrot.slane %v668, %v688
      %v707 = vunpack.c.l.b16 %v652
      %v708 = vunpack.c.l.b16 %v653
      %v709 = vunpack.c.l.b16 %v654
      %v710 = vunpack.c.l.b16 %v655
      %v711 = vunpack.c.l.b16 %v656
      %v712 = vunpack.c.l.b16 %v657
      %v713 = vunpack.c.l.b16 %v658
      %v714 = vunpack.c.l.b16 %v659
      %v715 = vunpack.c.l.b16 %v660
      %v716 = vunpack.c.l.b16 %v661
      %v717 = vunpack.c.l.b16 %v662
      %v718 = vunpack.c.l.b16 %v663
      %v719 = vunpack.c.l.b16 %v664
      %v720 = vunpack.c.l.b16 %v665
      %v721 = vunpack.c.l.b16 %v666
      %v722 = vunpack.c.l.b16 %v667
      %v723 = vpack.c.b16 %v708, %v707
      %v724 = vpack.c.b16 %v710, %v709
      %v725 = vpack.c.b16 %v712, %v711
      %v726 = vpack.c.b16 %v714, %v713
      %v727 = vpack.c.b16 %v716, %v715
      %v728 = vpack.c.b16 %v718, %v717
      %v729 = vpack.c.b16 %v720, %v719
      %v730 = vpack.c.b16 %v722, %v721
      %739 = vmatprep.subr.bf16.mxu0 0
      %740 = vmatpush1.bf16.msra.mxu0 %v723
      %741 = vmatprep.subr.bf16.mxu0 0
      %742 = vmatpush1.bf16.msra.mxu0 %v724
      %743 = vmatprep.subr.bf16.mxu0 0
      %744 = vmatpush1.bf16.msra.mxu0 %v725
      %745 = vmatprep.subr.bf16.mxu0 0
      %746 = vmatpush1.bf16.msra.mxu0 %v726
      %747 = vmatprep.subr.bf16.mxu0 0
      %748 = vmatpush1.bf16.msra.mxu0 %v727
      %749 = vmatprep.subr.bf16.mxu0 0
      %750 = vmatpush1.bf16.msra.mxu0 %v728
      %751 = vmatprep.subr.bf16.mxu0 0
      %752 = vmatpush1.bf16.msra.mxu0 %v729
      %753 = vmatprep.subr.bf16.mxu0 0
      %754 = vmatpush1.bf16.msra.mxu0 %v730
      %755 = vmatprep.subr.bf16.mxu0 0
      %756 = vmatpush1.bf16.msra.mxu0 0
      %757 = vmatprep.subr.bf16.mxu0 0
      %758 = vmatpush1.bf16.msra.mxu0 0
      %759 = vmatprep.subr.bf16.mxu0 0
      %760 = vmatpush1.bf16.msra.mxu0 0
      %761 = vmatprep.subr.bf16.mxu0 0
      %762 = vmatpush1.bf16.msra.mxu0 0
      %763 = vmatprep.subr.bf16.mxu0 0
      %764 = vmatpush1.bf16.msra.mxu0 0
      %765 = vmatprep.subr.bf16.mxu0 0
      %766 = vmatpush1.bf16.msra.mxu0 0
      %767 = vmatprep.subr.bf16.mxu0 0
      %768 = vmatpush1.bf16.msra.mxu0 0
      %769 = vmatprep.subr.bf16.mxu0 0
      %770 = vmatpush1.bf16.msra.mxu0 0
      %771 = vmatprep.mubr.bf16.mxu0 0
      %772 = vmatmul.mubr.bf16.gmra.mrb[0].mxu0 %v669
      %v773 = vpop.f32.mrb[0].mxu0
      %v774 = vadd.f32 %v689, %v773
      %v775 = vpop.f32.mrb[0].mxu0
      %v776 = vpop.f32.mrb[0].mxu0
      %v777 = vadd.f32 %v689, %v776
      %v778 = vpop.f32.mrb[0].mxu0
      %779 = vmatprep.mubr.bf16.mxu0 0
      %780 = vmatmul.mubr.bf16.gmra.mrb[0].mxu0 %v670
      %v781 = vpop.f32.mrb[0].mxu0
      %v782 = vadd.f32 %v689, %v781
      %v783 = vpop.f32.mrb[0].mxu0
      %v784 = vpop.f32.mrb[0].mxu0
      %v785 = vadd.f32 %v689, %v784
      %v786 = vpop.f32.mrb[0].mxu0
      %787 = vmatprep.mubr.bf16.mxu0 0
      %788 = vmatmul.mubr.bf16.gmra.mrb[0].mxu0 %v671
      %v789 = vpop.f32.mrb[0].mxu0
      %v790 = vadd.f32 %v689, %v789
      %v791 = vpop.f32.mrb[0].mxu0
      %v792 = vpop.f32.mrb[0].mxu0
      %v793 = vadd.f32 %v689, %v792
      %v794 = vpop.f32.mrb[0].mxu0
      %795 = vmatprep.mubr.bf16.mxu0 0
      %796 = vmatmul.mubr.bf16.gmra.mrb[0].mxu0 %v672
      %v797 = vpop.f32.mrb[0].mxu0
      %v798 = vadd.f32 %v689, %v797
      %v799 = vpop.f32.mrb[0].mxu0
      %v800 = vpop.f32.mrb[0].mxu0
      %v801 = vadd.f32 %v689, %v800
      %v802 = vpop.f32.mrb[0].mxu0
      %803 = vmatprep.mubr.bf16.mxu0 0
      %804 = vmatmul.mubr.bf16.gmra.mrb[0].mxu0 %v673
      %v805 = vpop.f32.mrb[0].mxu0
      %v806 = vadd.f32 %v689, %v805
      %v807 = vpop.f32.mrb[0].mxu0
      %v808 = vpop.f32.mrb[0].mxu0
      %v809 = vadd.f32 %v689, %v808
      %v810 = vpop.f32.mrb[0].mxu0
      %811 = vmatprep.mubr.bf16.mxu0 0
      %812 = vmatmul.mubr.bf16.gmra.mrb[0].mxu0 %v674
      %v813 = vpop.f32.mrb[0].mxu0
      %v814 = vadd.f32 %v689, %v813
      %v815 = vpop.f32.mrb[0].mxu0
      %v816 = vpop.f32.mrb[0].mxu0
      %v817 = vadd.f32 %v689, %v816
      %v818 = vpop.f32.mrb[0].mxu0
      %819 = vmatprep.mubr.bf16.mxu0 0
      %820 = vmatmul.mubr.bf16.gmra.mrb[0].mxu0 %v675
      %v821 = vpop.f32.mrb[0].mxu0
      %v822 = vadd.f32 %v689, %v821
      %v823 = vpop.f32.mrb[0].mxu0
      %v824 = vpop.f32.mrb[0].mxu0
      %v825 = vadd.f32 %v689, %v824
      %v826 = vpop.f32.mrb[0].mxu0
      %827 = vmatprep.mubr.bf16.mxu0 0
      %828 = vmatmul.mubr.bf16.gmra.mrb[0].mxu0 %v676
      %v829 = vpop.f32.mrb[0].mxu0
      %v830 = vadd.f32 %v689, %v829
      %v831 = vpop.f32.mrb[0].mxu0
      %v832 = vpop.f32.mrb[0].mxu0
      %v833 = vadd.f32 %v689, %v832
      %v834 = vpop.f32.mrb[0].mxu0
      %835 = vmatprep.mubr.bf16.mxu0 0
      %836 = vmatmul.mubr.bf16.gmra.mrb[0].mxu0 %v677
      %v837 = vpop.f32.mrb[0].mxu0
      %v838 = vadd.f32 %v689, %v837
      %v839 = vpop.f32.mrb[0].mxu0
      %v840 = vpop.f32.mrb[0].mxu0
      %v841 = vadd.f32 %v689, %v840
      %v842 = vpop.f32.mrb[0].mxu0
      %843 = vmatprep.mubr.bf16.mxu0 0
      %844 = vmatmul.mubr.bf16.gmra.mrb[0].mxu0 %v678
      %v845 = vpop.f32.mrb[0].mxu0
      %v846 = vadd.f32 %v689, %v845
      %v847 = vpop.f32.mrb[0].mxu0
      %v848 = vpop.f32.mrb[0].mxu0
      %v849 = vadd.f32 %v689, %v848
      %v850 = vpop.f32.mrb[0].mxu0
      %851 = vmatprep.mubr.bf16.mxu0 0
      %852 = vmatmul.mubr.bf16.gmra.mrb[0].mxu0 %v679
      %v853 = vpop.f32.mrb[0].mxu0
      %v854 = vadd.f32 %v689, %v853
      %v855 = vpop.f32.mrb[0].mxu0
      %v856 = vpop.f32.mrb[0].mxu0
      %v857 = vadd.f32 %v689, %v856
      %v858 = vpop.f32.mrb[0].mxu0
      %859 = vmatprep.mubr.bf16.mxu0 0
      %860 = vmatmul.mubr.bf16.gmra.mrb[0].mxu0 %v680
      %v861 = vpop.f32.mrb[0].mxu0
      %v862 = vadd.f32 %v689, %v861
      %v863 = vpop.f32.mrb[0].mxu0
      %v864 = vpop.f32.mrb[0].mxu0
      %v865 = vadd.f32 %v689, %v864
      %v866 = vpop.f32.mrb[0].mxu0
      %867 = vmatprep.mubr.bf16.mxu0 0
      %868 = vmatmul.mubr.bf16.gmra.mrb[0].mxu0 %v681
      %v869 = vpop.f32.mrb[0].mxu0
      %v870 = vadd.f32 %v689, %v869
      %v871 = vpop.f32.mrb[0].mxu0
      %v872 = vpop.f32.mrb[0].mxu0
      %v873 = vadd.f32 %v689, %v872
      %v874 = vpop.f32.mrb[0].mxu0
      %875 = vmatprep.mubr.bf16.mxu0 0
      %876 = vmatmul.mubr.bf16.gmra.mrb[0].mxu0 %v682
      %v877 = vpop.f32.mrb[0].mxu0
      %v878 = vadd.f32 %v689, %v877
      %v879 = vpop.f32.mrb[0].mxu0
      %v880 = vpop.f32.mrb[0].mxu0
      %v881 = vadd.f32 %v689, %v880
      %v882 = vpop.f32.mrb[0].mxu0
      %883 = vmatprep.mubr.bf16.mxu0 0
      %884 = vmatmul.mubr.bf16.gmra.mrb[0].mxu0 %v683
      %v885 = vpop.f32.mrb[0].mxu0
      %v886 = vadd.f32 %v689, %v885
      %v887 = vpop.f32.mrb[0].mxu0
      %v888 = vpop.f32.mrb[0].mxu0
      %v889 = vadd.f32 %v689, %v888
      %v890 = vpop.f32.mrb[0].mxu0
      %891 = vmatprep.mubr.bf16.mxu0 0
      %892 = vmatmul.mubr.bf16.gmra.mrb[0].mxu0 %v684
      %v893 = vpop.f32.mrb[0].mxu0
      %v894 = vadd.f32 %v689, %v893
      %v895 = vpop.f32.mrb[0].mxu0
      %v896 = vpop.f32.mrb[0].mxu0
      %v897 = vadd.f32 %v689, %v896
      %v898 = vpop.f32.mrb[0].mxu0
      %899 = vdwg.mxu0
      %vm900 = vcmp.ge.f32.partialorder %v774, 0.0
      %vm901 = vcmp.ge.f32.partialorder %v777, 0.0
      %vm902 = vcmp.ge.f32.partialorder %v782, 0.0
      %vm903 = vcmp.ge.f32.partialorder %v785, 0.0
      %vm904 = vcmp.ge.f32.partialorder %v790, 0.0
      %vm905 = vcmp.ge.f32.partialorder %v793, 0.0
      %vm906 = vcmp.ge.f32.partialorder %v798, 0.0
      %vm907 = vcmp.ge.f32.partialorder %v801, 0.0
      %vm908 = vcmp.ge.f32.partialorder %v806, 0.0
      %vm909 = vcmp.ge.f32.partialorder %v809, 0.0
      %vm910 = vcmp.ge.f32.partialorder %v814, 0.0
      %vm911 = vcmp.ge.f32.partialorder %v817, 0.0
      %vm912 = vcmp.ge.f32.partialorder %v822, 0.0
      %vm913 = vcmp.ge.f32.partialorder %v825, 0.0
      %vm914 = vcmp.ge.f32.partialorder %v830, 0.0
      %vm915 = vcmp.ge.f32.partialorder %v833, 0.0
      %vm916 = vcmp.ge.f32.partialorder %v838, 0.0
      %vm917 = vcmp.ge.f32.partialorder %v841, 0.0
      %vm918 = vcmp.ge.f32.partialorder %v846, 0.0
      %vm919 = vcmp.ge.f32.partialorder %v849, 0.0
      %vm920 = vcmp.ge.f32.partialorder %v854, 0.0
      %vm921 = vcmp.ge.f32.partialorder %v857, 0.0
      %vm922 = vcmp.ge.f32.partialorder %v862, 0.0
      %vm923 = vcmp.ge.f32.partialorder %v865, 0.0
      %vm924 = vcmp.ge.f32.partialorder %v870, 0.0
      %vm925 = vcmp.ge.f32.partialorder %v873, 0.0
      %vm926 = vcmp.ge.f32.partialorder %v878, 0.0
      %vm927 = vcmp.ge.f32.partialorder %v881, 0.0
      %vm928 = vcmp.ge.f32.partialorder %v886, 0.0
      %vm929 = vcmp.ge.f32.partialorder %v889, 0.0
      %vm930 = vcmp.ge.f32.partialorder %v894, 0.0
      %vm931 = vcmp.ge.f32.partialorder %v897, 0.0
      %v932 = vmul.f32 %v774, 0.01
      %v933 = vmul.f32 %v777, 0.01
      %v934 = vmul.f32 %v782, 0.01
      %v935 = vmul.f32 %v785, 0.01
      %v936 = vmul.f32 %v790, 0.01
      %v937 = vmul.f32 %v793, 0.01
      %v938 = vmul.f32 %v798, 0.01
      %v939 = vmul.f32 %v801, 0.01
      %v940 = vmul.f32 %v806, 0.01
      %v941 = vmul.f32 %v809, 0.01
      %v942 = vmul.f32 %v814, 0.01
      %v943 = vmul.f32 %v817, 0.01
      %v944 = vmul.f32 %v822, 0.01
      %v945 = vmul.f32 %v825, 0.01
      %v946 = vmul.f32 %v830, 0.01
      %v947 = vmul.f32 %v833, 0.01
      %v948 = vmul.f32 %v838, 0.01
      %v949 = vmul.f32 %v841, 0.01
      %v950 = vmul.f32 %v846, 0.01
      %v951 = vmul.f32 %v849, 0.01
      %v952 = vmul.f32 %v854, 0.01
      %v953 = vmul.f32 %v857, 0.01
      %v954 = vmul.f32 %v862, 0.01
      %v955 = vmul.f32 %v865, 0.01
      %v956 = vmul.f32 %v870, 0.01
      %v957 = vmul.f32 %v873, 0.01
      %v958 = vmul.f32 %v878, 0.01
      %v959 = vmul.f32 %v881, 0.01
      %v960 = vmul.f32 %v886, 0.01
      %v961 = vmul.f32 %v889, 0.01
      %v962 = vmul.f32 %v894, 0.01
      %v963 = vmul.f32 %v897, 0.01
      %v964 = vsel %vm900, %v774, %v932
      %v965 = vsel %vm901, %v777, %v933
      %v966 = vsel %vm902, %v782, %v934
      %v967 = vsel %vm903, %v785, %v935
      %v968 = vsel %vm904, %v790, %v936
      %v969 = vsel %vm905, %v793, %v937
      %v970 = vsel %vm906, %v798, %v938
      %v971 = vsel %vm907, %v801, %v939
      %v972 = vsel %vm908, %v806, %v940
      %v973 = vsel %vm909, %v809, %v941
      %v974 = vsel %vm910, %v814, %v942
      %v975 = vsel %vm911, %v817, %v943
      %v976 = vsel %vm912, %v822, %v944
      %v977 = vsel %vm913, %v825, %v945
      %v978 = vsel %vm914, %v830, %v946
      %v979 = vsel %vm915, %v833, %v947
      %v980 = vsel %vm916, %v838, %v948
      %v981 = vsel %vm917, %v841, %v949
      %v982 = vsel %vm918, %v846, %v950
      %v983 = vsel %vm919, %v849, %v951
      %v984 = vsel %vm920, %v854, %v952
      %v985 = vsel %vm921, %v857, %v953
      %v986 = vsel %vm922, %v862, %v954
      %v987 = vsel %vm923, %v865, %v955
      %v988 = vsel %vm924, %v870, %v956
      %v989 = vsel %vm925, %v873, %v957
      %v990 = vsel %vm926, %v878, %v958
      %v991 = vsel %vm927, %v881, %v959
      %v992 = vsel %vm928, %v886, %v960
      %v993 = vsel %vm929, %v889, %v961
      %v994 = vsel %vm930, %v894, %v962
      %v995 = vsel %vm931, %v897, %v963
      %v996 = vld [vmem:[%s5] sm:$0xf]
      %v997 = vld [vmem:[%s5 + $0x4] sm:$0xf]
      %v998 = vld [vmem:[%s5 + $0x8] sm:$0xf]
      %v999 = vld [vmem:[%s5 + $0xc] sm:$0xf]
      %v1000 = vld [vmem:[%s5 + $0x10] sm:$0xf]
      %v1001 = vld [vmem:[%s5 + $0x14] sm:$0xf]
      %v1002 = vld [vmem:[%s5 + $0x18] sm:$0xf]
      %v1003 = vld [vmem:[%s5 + $0x1c] sm:$0xf]
      %v1004 = vld [vmem:[%s5 + $0x20] sm:$0xf]
      %v1005 = vld [vmem:[%s5 + $0x24] sm:$0xf]
      %v1006 = vld [vmem:[%s5 + $0x28] sm:$0xf]
      %v1007 = vld [vmem:[%s5 + $0x2c] sm:$0xf]
      %v1008 = vld [vmem:[%s5 + $0x30] sm:$0xf]
      %v1009 = vld [vmem:[%s5 + $0x34] sm:$0xf]
      %v1010 = vld [vmem:[%s5 + $0x38] sm:$0xf]
      %v1011 = vld [vmem:[%s5 + $0x3c] sm:$0xf]
      %v1012 = vld [vmem:[%s6] sm:$0x1]
      %v1013 = vpack.c.bf16 %v965, %v964
      %v1014 = vpack.c.bf16 %v967, %v966
      %v1015 = vpack.c.bf16 %v969, %v968
      %v1016 = vpack.c.bf16 %v971, %v970
      %v1017 = vpack.c.bf16 %v973, %v972
      %v1018 = vpack.c.bf16 %v975, %v974
      %v1019 = vpack.c.bf16 %v977, %v976
      %v1020 = vpack.c.bf16 %v979, %v978
      %v1021 = vpack.c.bf16 %v981, %v980
      %v1022 = vpack.c.bf16 %v983, %v982
      %v1023 = vpack.c.bf16 %v985, %v984
      %v1024 = vpack.c.bf16 %v987, %v986
      %v1025 = vpack.c.bf16 %v989, %v988
      %v1026 = vpack.c.bf16 %v991, %v990
      %v1027 = vpack.c.bf16 %v993, %v992
      %v1028 = vpack.c.bf16 %v995, %v994
      %v1030 = vlaneseq
      %v1031 = vshrl.u32 %v1030, 7
      %v1032 = vsub.s32 0, %v1031
      %v1033 = vrot.slane %v1012, %v1032
      %v1051 = vunpack.c.l.b16 %v996
      %v1052 = vunpack.c.l.b16 %v997
      %v1053 = vunpack.c.l.b16 %v998
      %v1054 = vunpack.c.l.b16 %v999
      %v1055 = vunpack.c.l.b16 %v1000
      %v1056 = vunpack.c.l.b16 %v1001
      %v1057 = vunpack.c.l.b16 %v1002
      %v1058 = vunpack.c.l.b16 %v1003
      %v1059 = vunpack.c.l.b16 %v1004
      %v1060 = vunpack.c.l.b16 %v1005
      %v1061 = vunpack.c.l.b16 %v1006
      %v1062 = vunpack.c.l.b16 %v1007
      %v1063 = vunpack.c.l.b16 %v1008
      %v1064 = vunpack.c.l.b16 %v1009
      %v1065 = vunpack.c.l.b16 %v1010
      %v1066 = vunpack.c.l.b16 %v1011
      %v1067 = vpack.c.b16 %v1052, %v1051
      %v1068 = vpack.c.b16 %v1054, %v1053
      %v1069 = vpack.c.b16 %v1056, %v1055
      %v1070 = vpack.c.b16 %v1058, %v1057
      %v1071 = vpack.c.b16 %v1060, %v1059
      %v1072 = vpack.c.b16 %v1062, %v1061
      %v1073 = vpack.c.b16 %v1064, %v1063
      %v1074 = vpack.c.b16 %v1066, %v1065
      %1083 = vmatprep.subr.bf16.mxu0 0
      %1084 = vmatpush1.bf16.msra.mxu0 %v1067
      %1085 = vmatprep.subr.bf16.mxu0 0
      %1086 = vmatpush1.bf16.msra.mxu0 %v1068
      %1087 = vmatprep.subr.bf16.mxu0 0
      %1088 = vmatpush1.bf16.msra.mxu0 %v1069
      %1089 = vmatprep.subr.bf16.mxu0 0
      %1090 = vmatpush1.bf16.msra.mxu0 %v1070
      %1091 = vmatprep.subr.bf16.mxu0 0
      %1092 = vmatpush1.bf16.msra.mxu0 %v1071
      %1093 = vmatprep.subr.bf16.mxu0 0
      %1094 = vmatpush1.bf16.msra.mxu0 %v1072
      %1095 = vmatprep.subr.bf16.mxu0 0
      %1096 = vmatpush1.bf16.msra.mxu0 %v1073
      %1097 = vmatprep.subr.bf16.mxu0 0
      %1098 = vmatpush1.bf16.msra.mxu0 %v1074
      %1099 = vmatprep.subr.bf16.mxu0 0
      %1100 = vmatpush1.bf16.msra.mxu0 0
      %1101 = vmatprep.subr.bf16.mxu0 0
      %1102 = vmatpush1.bf16.msra.mxu0 0
      %1103 = vmatprep.subr.bf16.mxu0 0
      %1104 = vmatpush1.bf16.msra.mxu0 0
      %1105 = vmatprep.subr.bf16.mxu0 0
      %1106 = vmatpush1.bf16.msra.mxu0 0
      %1107 = vmatprep.subr.bf16.mxu0 0
      %1108 = vmatpush1.bf16.msra.mxu0 0
      %1109 = vmatprep.subr.bf16.mxu0 0
      %1110 = vmatpush1.bf16.msra.mxu0 0
      %1111 = vmatprep.subr.bf16.mxu0 0
      %1112 = vmatpush1.bf16.msra.mxu0 0
      %1113 = vmatprep.subr.bf16.mxu0 0
      %1114 = vmatpush1.bf16.msra.mxu0 0
      %1115 = vmatprep.mubr.bf16.mxu0 0
      %1116 = vmatmul.mubr.bf16.gmra.mrb[0].mxu0 %v1013
      %v1117 = vpop.f32.mrb[0].mxu0
      %v1118 = vadd.f32 %v1033, %v1117
      %v1119 = vpop.f32.mrb[0].mxu0
      %v1120 = vpop.f32.mrb[0].mxu0
      %v1121 = vadd.f32 %v1033, %v1120
      %v1122 = vpop.f32.mrb[0].mxu0
      %1123 = vmatprep.mubr.bf16.mxu0 0
      %1124 = vmatmul.mubr.bf16.gmra.mrb[0].mxu0 %v1014
      %v1125 = vpop.f32.mrb[0].mxu0
      %v1126 = vadd.f32 %v1033, %v1125
      %v1127 = vpop.f32.mrb[0].mxu0
      %v1128 = vpop.f32.mrb[0].mxu0
      %v1129 = vadd.f32 %v1033, %v1128
      %v1130 = vpop.f32.mrb[0].mxu0
      %1131 = vmatprep.mubr.bf16.mxu0 0
      %1132 = vmatmul.mubr.bf16.gmra.mrb[0].mxu0 %v1015
      %v1133 = vpop.f32.mrb[0].mxu0
      %v1134 = vadd.f32 %v1033, %v1133
      %v1135 = vpop.f32.mrb[0].mxu0
      %v1136 = vpop.f32.mrb[0].mxu0
      %v1137 = vadd.f32 %v1033, %v1136
      %v1138 = vpop.f32.mrb[0].mxu0
      %1139 = vmatprep.mubr.bf16.mxu0 0
      %1140 = vmatmul.mubr.bf16.gmra.mrb[0].mxu0 %v1016
      %v1141 = vpop.f32.mrb[0].mxu0
      %v1142 = vadd.f32 %v1033, %v1141
      %v1143 = vpop.f32.mrb[0].mxu0
      %v1144 = vpop.f32.mrb[0].mxu0
      %v1145 = vadd.f32 %v1033, %v1144
      %v1146 = vpop.f32.mrb[0].mxu0
      %1147 = vmatprep.mubr.bf16.mxu0 0
      %1148 = vmatmul.mubr.bf16.gmra.mrb[0].mxu0 %v1017
      %v1149 = vpop.f32.mrb[0].mxu0
      %v1150 = vadd.f32 %v1033, %v1149
      %v1151 = vpop.f32.mrb[0].mxu0
      %v1152 = vpop.f32.mrb[0].mxu0
      %v1153 = vadd.f32 %v1033, %v1152
      %v1154 = vpop.f32.mrb[0].mxu0
      %1155 = vmatprep.mubr.bf16.mxu0 0
      %1156 = vmatmul.mubr.bf16.gmra.mrb[0].mxu0 %v1018
      %v1157 = vpop.f32.mrb[0].mxu0
      %v1158 = vadd.f32 %v1033, %v1157
      %v1159 = vpop.f32.mrb[0].mxu0
      %v1160 = vpop.f32.mrb[0].mxu0
      %v1161 = vadd.f32 %v1033, %v1160
      %v1162 = vpop.f32.mrb[0].mxu0
      %1163 = vmatprep.mubr.bf16.mxu0 0
      %1164 = vmatmul.mubr.bf16.gmra.mrb[0].mxu0 %v1019
      %v1165 = vpop.f32.mrb[0].mxu0
      %v1166 = vadd.f32 %v1033, %v1165
      %v1167 = vpop.f32.mrb[0].mxu0
      %v1168 = vpop.f32.mrb[0].mxu0
      %v1169 = vadd.f32 %v1033, %v1168
      %v1170 = vpop.f32.mrb[0].mxu0
      %1171 = vmatprep.mubr.bf16.mxu0 0
      %1172 = vmatmul.mubr.bf16.gmra.mrb[0].mxu0 %v1020
      %v1173 = vpop.f32.mrb[0].mxu0
      %v1174 = vadd.f32 %v1033, %v1173
      %v1175 = vpop.f32.mrb[0].mxu0
      %v1176 = vpop.f32.mrb[0].mxu0
      %v1177 = vadd.f32 %v1033, %v1176
      %v1178 = vpop.f32.mrb[0].mxu0
      %1179 = vmatprep.mubr.bf16.mxu0 0
      %1180 = vmatmul.mubr.bf16.gmra.mrb[0].mxu0 %v1021
      %v1181 = vpop.f32.mrb[0].mxu0
      %v1182 = vadd.f32 %v1033, %v1181
      %v1183 = vpop.f32.mrb[0].mxu0
      %v1184 = vpop.f32.mrb[0].mxu0
      %v1185 = vadd.f32 %v1033, %v1184
      %v1186 = vpop.f32.mrb[0].mxu0
      %1187 = vmatprep.mubr.bf16.mxu0 0
      %1188 = vmatmul.mubr.bf16.gmra.mrb[0].mxu0 %v1022
      %v1189 = vpop.f32.mrb[0].mxu0
      %v1190 = vadd.f32 %v1033, %v1189
      %v1191 = vpop.f32.mrb[0].mxu0
      %v1192 = vpop.f32.mrb[0].mxu0
      %v1193 = vadd.f32 %v1033, %v1192
      %v1194 = vpop.f32.mrb[0].mxu0
      %1195 = vmatprep.mubr.bf16.mxu0 0
      %1196 = vmatmul.mubr.bf16.gmra.mrb[0].mxu0 %v1023
      %v1197 = vpop.f32.mrb[0].mxu0
      %v1198 = vadd.f32 %v1033, %v1197
      %v1199 = vpop.f32.mrb[0].mxu0
      %v1200 = vpop.f32.mrb[0].mxu0
      %v1201 = vadd.f32 %v1033, %v1200
      %v1202 = vpop.f32.mrb[0].mxu0
      %1203 = vmatprep.mubr.bf16.mxu0 0
      %1204 = vmatmul.mubr.bf16.gmra.mrb[0].mxu0 %v1024
      %v1205 = vpop.f32.mrb[0].mxu0
      %v1206 = vadd.f32 %v1033, %v1205
      %v1207 = vpop.f32.mrb[0].mxu0
      %v1208 = vpop.f32.mrb[0].mxu0
      %v1209 = vadd.f32 %v1033, %v1208
      %v1210 = vpop.f32.mrb[0].mxu0
      %1211 = vmatprep.mubr.bf16.mxu0 0
      %1212 = vmatmul.mubr.bf16.gmra.mrb[0].mxu0 %v1025
      %v1213 = vpop.f32.mrb[0].mxu0
      %v1214 = vadd.f32 %v1033, %v1213
      %v1215 = vpop.f32.mrb[0].mxu0
      %v1216 = vpop.f32.mrb[0].mxu0
      %v1217 = vadd.f32 %v1033, %v1216
      %v1218 = vpop.f32.mrb[0].mxu0
      %1219 = vmatprep.mubr.bf16.mxu0 0
      %1220 = vmatmul.mubr.bf16.gmra.mrb[0].mxu0 %v1026
      %v1221 = vpop.f32.mrb[0].mxu0
      %v1222 = vadd.f32 %v1033, %v1221
      %v1223 = vpop.f32.mrb[0].mxu0
      %v1224 = vpop.f32.mrb[0].mxu0
      %v1225 = vadd.f32 %v1033, %v1224
      %v1226 = vpop.f32.mrb[0].mxu0
      %1227 = vmatprep.mubr.bf16.mxu0 0
      %1228 = vmatmul.mubr.bf16.gmra.mrb[0].mxu0 %v1027
      %v1229 = vpop.f32.mrb[0].mxu0
      %v1230 = vadd.f32 %v1033, %v1229
      %v1231 = vpop.f32.mrb[0].mxu0
      %v1232 = vpop.f32.mrb[0].mxu0
      %v1233 = vadd.f32 %v1033, %v1232
      %v1234 = vpop.f32.mrb[0].mxu0
      %1235 = vmatprep.mubr.bf16.mxu0 0
      %1236 = vmatmul.mubr.bf16.gmra.mrb[0].mxu0 %v1028
      %v1237 = vpop.f32.mrb[0].mxu0
      %v1238 = vadd.f32 %v1033, %v1237
      %v1239 = vpop.f32.mrb[0].mxu0
      %v1240 = vpop.f32.mrb[0].mxu0
      %v1241 = vadd.f32 %v1033, %v1240
      %v1242 = vpop.f32.mrb[0].mxu0
      %1243 = vdwg.mxu0
      %vm1244 = vcmask 31744
      %1245 = vst.msk [vmem:[%s280] sm:$0xff] %vm1244, %v1118
      %1246 = vst.msk [vmem:[%s280 + $0x8] sm:$0xff] %vm1244, %v1121
      %1247 = vst.msk [vmem:[%s280 + $0x10] sm:$0xff] %vm1244, %v1126
      %1248 = vst.msk [vmem:[%s280 + $0x18] sm:$0xff] %vm1244, %v1129
      %1249 = vst.msk [vmem:[%s280 + $0x20] sm:$0xff] %vm1244, %v1134
      %1250 = vst.msk [vmem:[%s280 + $0x28] sm:$0xff] %vm1244, %v1137
      %1251 = vst.msk [vmem:[%s280 + $0x30] sm:$0xff] %vm1244, %v1142
      %1252 = vst.msk [vmem:[%s280 + $0x38] sm:$0xff] %vm1244, %v1145
      %1253 = vst.msk [vmem:[%s280 + $0x40] sm:$0xff] %vm1244, %v1150
      %1254 = vst.msk [vmem:[%s280 + $0x48] sm:$0xff] %vm1244, %v1153
      %1255 = vst.msk [vmem:[%s280 + $0x50] sm:$0xff] %vm1244, %v1158
      %1256 = vst.msk [vmem:[%s280 + $0x58] sm:$0xff] %vm1244, %v1161
      %1257 = vst.msk [vmem:[%s280 + $0x60] sm:$0xff] %vm1244, %v1166
      %1258 = vst.msk [vmem:[%s280 + $0x68] sm:$0xff] %vm1244, %v1169
      %1259 = vst.msk [vmem:[%s280 + $0x70] sm:$0xff] %vm1244, %v1174
      %1260 = vst.msk [vmem:[%s280 + $0x78] sm:$0xff] %vm1244, %v1177
      %1261 = vst.msk [vmem:[%s280 + $0x80] sm:$0xff] %vm1244, %v1182
      %1262 = vst.msk [vmem:[%s280 + $0x88] sm:$0xff] %vm1244, %v1185
      %1263 = vst.msk [vmem:[%s280 + $0x90] sm:$0xff] %vm1244, %v1190
      %1264 = vst.msk [vmem:[%s280 + $0x98] sm:$0xff] %vm1244, %v1193
      %1265 = vst.msk [vmem:[%s280 + $0xa0] sm:$0xff] %vm1244, %v1198
      %1266 = vst.msk [vmem:[%s280 + $0xa8] sm:$0xff] %vm1244, %v1201
      %1267 = vst.msk [vmem:[%s280 + $0xb0] sm:$0xff] %vm1244, %v1206
      %1268 = vst.msk [vmem:[%s280 + $0xb8] sm:$0xff] %vm1244, %v1209
      %1269 = vst.msk [vmem:[%s280 + $0xc0] sm:$0xff] %vm1244, %v1214
      %1270 = vst.msk [vmem:[%s280 + $0xc8] sm:$0xff] %vm1244, %v1217
      %1271 = vst.msk [vmem:[%s280 + $0xd0] sm:$0xff] %vm1244, %v1222
      %1272 = vst.msk [vmem:[%s280 + $0xd8] sm:$0xff] %vm1244, %v1225
      %1273 = vst.msk [vmem:[%s280 + $0xe0] sm:$0xff] %vm1244, %v1230
      %1274 = vst.msk [vmem:[%s280 + $0xe8] sm:$0xff] %vm1244, %v1233
      %1275 = vst.msk [vmem:[%s280 + $0xf0] sm:$0xff] %vm1244, %v1238
      %1276 = vst.msk [vmem:[%s280 + $0xf8] sm:$0xff] %vm1244, %v1241
      %s1277 = smul.u32 32, %s18
      %p1278 = scmp.lt.s32.totalorder %s1277, 63
      %s1279 = scalar_select %p1278, %s1277, 63
      %s1280 = smul.addr %s1279, 8
      %s1281 = scalar_lea.vmem %s7, %s1280
      // Predicated region
      $region49: #{tpu_custom_call.1} parent=47 // pred_check
        %p1282 = pneg %p188
      $region50: #{tpu_custom_call.1} parent=47 // pred_check_branch
        %1284 = sbr.rel (%p1282) target = $region52
      $region51: #{tpu_custom_call.1} parent=47 // pred_region
        %s1285 = smul.u32 32, %s18
      $region52: #{tpu_custom_call.1} parent=47 // pred_fallthru
        _
    $region48: #{tpu_custom_call.1} parent=5 // pred_fallthru
      _
    %p1286 = scmp.le.s32.totalorder 2, %s13
    // Predicated region
    $region53: #{tpu_custom_call.1} parent=5 // pred_check
      %p1287 = pneg %p1286
    $region54: #{tpu_custom_call.1} parent=5 // pred_check_branch
      %1289 = sbr.rel (%p1287) target = $region56
    $region55: #{tpu_custom_call.1} parent=5 // pred_region
      %s1290 = ssub.s32 %s13, 2
      // Predicated region
      $region57: #{tpu_custom_call.1} parent=55 // pred_check
        %p1291 = pneg %p194
      $region58: #{tpu_custom_call.1} parent=55 // pred_check_branch
        %1293 = sbr.rel (%p1291) target = $region60
      $region59: #{tpu_custom_call.1} parent=55 // pred_region
        %s1294 = smul.u32 32, %s19
        %p1295 = scmp.lt.s32.totalorder %s1294, 63
        %s1296 = scalar_select %p1295, %s1294, 63
        %s1297 = smul.addr %s1296, 8
        %s1298 = scalar_lea.vmem %s7, %s1297
      $region60: #{tpu_custom_call.1} parent=55 // pred_fallthru
        _
    $region56: #{tpu_custom_call.1} parent=5 // pred_fallthru
      _
  $region6: #{tpu_custom_call.1} parent=0 // loop_footer
    %s17 = sadd.s32 1, %s13
  $region7: #{tpu_custom_call.1} parent=0 // loop_footer_branch
    %12 = sbr.rel target = $region3
  $region8: #{tpu_custom_call.1} parent=0 // loop_exit
    _

</llo_original>
